<compile_context>
chip_gen: v7x
topology: tpu7x:2x2x1
jax: 0.10.0
libtpu: 0.0.40
codegen_flags: <defaults>
</compile_context>

<pallas_src>
import functools

import jax
import jax.numpy as jnp
import numpy as np
from jax.experimental import pallas as pl
from jax.experimental.pallas import tpu as pltpu


def _conv_bias_relu_kernel(x_ref, w_ref, b_ref, o_ref, *, stride, ksize):
    # x_ref: (Hp, Wp, Cin)        full padded image for this batch element
    # w_ref: (k*k*Cin, Cout_p)    BN-folded conv weights (HWIO flattened on K)
    # b_ref: (1, Cout_p)          BN-folded bias (f32)
    # o_ref: (TILE_HO, Wo, Cout_p)
    tile_ho, Wo, cout_p = o_ref.shape
    Cin = x_ref.shape[-1]
    rows = (tile_ho - 1) * stride + ksize          # input rows needed (with halo)

    t = pl.program_id(1)
    row_step = tile_ho * stride
    r0 = pl.multiple_of(t * row_step, row_step)
    x = x_ref[pl.ds(r0, rows)]                     # (rows, Wp, Cin)

    # Build the im2col tile once: (TILE_HO, Wo, k*k*Cin).  Order of the K axis
    # (kh, kw, cin) matches the wrapper's weight reshape.
    pieces = []
    for kh in range(ksize):
        for kw in range(ksize):
            if stride == 1:
                patch = jax.lax.slice(x, (kh, kw, 0),
                                      (kh + tile_ho, kw + Wo, Cin))
            else:
                patch = jax.lax.slice(
                    x, (kh, kw, 0),
                    (kh + (tile_ho - 1) * stride + 1,
                     kw + (Wo - 1) * stride + 1, Cin),
                    (stride, stride, 1))
            pieces.append(patch)                   # (tile_ho, Wo, Cin)
    im2col = jnp.concatenate(pieces, axis=-1)      # (tile_ho, Wo, k*k*Cin)
    im2col = im2col.reshape(tile_ho * Wo, ksize * ksize * Cin)

    # One MXU pass with contraction depth k*k*Cin, f32 accumulation.
    acc = jnp.dot(im2col, w_ref[...], preferred_element_type=jnp.float32)

    # Epilogue: folded-BN bias + ReLU, then cast + lane-dense store.
    y = jnp.maximum(acc + b_ref[...], 0.0)
    o_ref[...] = y.reshape(tile_ho, Wo, cout_p).astype(o_ref.dtype)


def _pick_tile_ho(Ho, Wo, K, cout_p, x_bytes, o_bytes,
                  target_rows=256, budget=6 * 1024 * 1024):
    """Largest divisor of Ho whose per-tile working set fits the budget.

    Stops growing once the matmul M dim (tile_ho * Wo) reaches ~target_rows so
    big feature maps still get several pipeline steps per image.
    """
    best = 1
    for t in range(1, Ho + 1):
        if Ho % t:
            continue
        rows = t * Wo
        work = (rows * cout_p * 4                      # f32 accumulator / epilogue
                + rows * K * max(x_bytes, 4)           # im2col tile
                + 2 * rows * cout_p * o_bytes)         # double-buffered out block
        if work > budget:
            break
        best = t
        if rows >= target_rows:
            break
    return best


def conv_bn_relu(x_nchw, w_oihw, b_conv, gamma, beta, run_mean, run_var,
                 *, stride=1, padding=0, eps=1e-5, compute_dtype=None):
    """Forward of the PyTorch `Conv` module (Conv2d + BN(eval) + ReLU), NCHW in/out."""
    N, Cin, H, W = x_nchw.shape
    Cout, _, k, _ = w_oihw.shape
    out_dtype = x_nchw.dtype
    if compute_dtype is None:
        compute_dtype = out_dtype

    # ---- Fold BatchNorm (running-stats / eval semantics) into conv w & b. ----
    scale = gamma.astype(jnp.float32) * jax.lax.rsqrt(
        run_var.astype(jnp.float32) + eps)                         # (Cout,)
    w_folded = w_oihw.astype(jnp.float32) * scale[:, None, None, None]
    b_folded = ((b_conv.astype(jnp.float32) - run_mean.astype(jnp.float32))
                * scale + beta.astype(jnp.float32))

    # OIHW -> HWIO -> (k*k*Cin, Cout_p); pad Cout to a lane-dense multiple of 128.
    cout_p = ((Cout + 127) // 128) * 128
    w_hwio = jnp.transpose(w_folded, (2, 3, 1, 0))                 # (k,k,Cin,Cout)
    w_hwio = jnp.pad(w_hwio, ((0, 0), (0, 0), (0, 0), (0, cout_p - Cout)))
    K = k * k * Cin
    w2d = w_hwio.reshape(K, cout_p).astype(compute_dtype)
    b_row = jnp.pad(b_folded, (0, cout_p - Cout)).reshape(1, cout_p)   # f32

    # NCHW -> NHWC + spatial zero pad (kept in wrapper for simplicity).
    x_nhwc = jnp.transpose(x_nchw, (0, 2, 3, 1)).astype(compute_dtype)
    x_pad = jnp.pad(x_nhwc, ((0, 0), (padding, padding),
                             (padding, padding), (0, 0)))

    Hp, Wp = H + 2 * padding, W + 2 * padding
    Ho = (Hp - k) // stride + 1
    Wo = (Wp - k) // stride + 1

    x_bytes = jnp.dtype(compute_dtype).itemsize
    o_bytes = jnp.dtype(out_dtype).itemsize
    tile_ho = _pick_tile_ho(Ho, Wo, K, cout_p, x_bytes, o_bytes)
    n_tiles = Ho // tile_ho

    # Explicit scoped-VMEM budget derived from the double-buffered blocks.
    block_bytes = (2 * Hp * Wp * Cin * x_bytes          # input image (dbl-buffered)
                   + 2 * K * cout_p * x_bytes           # weights
                   + 2 * cout_p * 4                     # bias
                   + 2 * tile_ho * Wo * cout_p * o_bytes)   # output tile
    vmem_limit = int(min(64 * 1024 * 1024,
                         max(32 * 1024 * 1024, 4 * block_bytes)))

    kernel = functools.partial(_conv_bias_relu_kernel, stride=stride, ksize=k)

    out_nhwc = pl.pallas_call(
        kernel,
        out_shape=jax.ShapeDtypeStruct((N, Ho, Wo, cout_p), out_dtype),
        grid_spec=pltpu.PrefetchScalarGridSpec(
            num_scalar_prefetch=0,
            grid=(N, n_tiles),
            in_specs=[
                # Full padded image per batch element; block index is constant
                # across the tile axis, so it is DMA'd once per batch element.
                pl.BlockSpec((None, Hp, Wp, Cin), lambda n, t: (n, 0, 0, 0)),
                pl.BlockSpec((K, cout_p), lambda n, t: (0, 0)),
                pl.BlockSpec((1, cout_p), lambda n, t: (0, 0)),
            ],
            out_specs=pl.BlockSpec((None, tile_ho, Wo, cout_p),
                                   lambda n, t: (n, t, 0, 0)),
        ),
        compiler_params=pltpu.CompilerParams(
            dimension_semantics=("parallel", "parallel"),
            vmem_limit_bytes=vmem_limit),
    )(x_pad, w2d, b_row)

    # Drop the lane padding, NHWC -> NCHW to match PyTorch output convention.
    out = out_nhwc[:, :, :, :Cout]
    return jnp.transpose(out, (0, 3, 1, 2)).astype(out_dtype)


def _reference(x_nchw, w_oihw, b_conv, gamma, beta, run_mean, run_var,
               *, stride, padding, eps=1e-5):
    y = jax.lax.conv_general_dilated(
        x_nchw, w_oihw,
        window_strides=(stride, stride),
        padding=((padding, padding), (padding, padding)),
        dimension_numbers=("NCHW", "OIHW", "NCHW"),
    )
    y = y + b_conv[None, :, None, None]
    y = (y - run_mean[None, :, None, None]) * jax.lax.rsqrt(
        run_var[None, :, None, None] + eps)
    y = y * gamma[None, :, None, None] + beta[None, :, None, None]
    return jnp.maximum(y, 0.0)


if __name__ == "__main__":
    # Small, deterministic example consistent with the module's forward.
    N, Cin, H, W = 2, 4, 16, 16
    Cout, k, stride, padding = 8, 3, 1, 1

    key = jax.random.PRNGKey(0)
    kx, kw, kb, kg, kbe, km, kv = jax.random.split(key, 7)

    x = jax.random.normal(kx, (N, Cin, H, W), jnp.float32)
    w = jax.random.normal(kw, (Cout, Cin, k, k), jnp.float32) * 0.1
    b_conv = jax.random.normal(kb, (Cout,), jnp.float32) * 0.1
    gamma = 1.0 + 0.1 * jax.random.normal(kg, (Cout,), jnp.float32)
    beta = 0.1 * jax.random.normal(kbe, (Cout,), jnp.float32)
    run_mean = 0.1 * jax.random.normal(km, (Cout,), jnp.float32)
    run_var = jax.random.uniform(kv, (Cout,), jnp.float32, minval=0.5, maxval=1.5)

    ref = _reference(x, w, b_conv, gamma, beta, run_mean, run_var,
                     stride=stride, padding=padding)

    # f32 path: exact module (eval-mode) semantics.
    out = conv_bn_relu(x, w, b_conv, gamma, beta, run_mean, run_var,
                       stride=stride, padding=padding)
    out = jax.block_until_ready(out)
    np.testing.assert_allclose(np.asarray(out), np.asarray(ref),
                               rtol=1e-4, atol=1e-4)

    # bf16 matmul operands (MXU-native on v6e/v7x), f32 accumulation/epilogue.
    out_bf16 = conv_bn_relu(x, w, b_conv, gamma, beta, run_mean, run_var,
                            stride=stride, padding=padding,
                            compute_dtype=jnp.bfloat16)
    out_bf16 = jax.block_until_ready(out_bf16)
    np.testing.assert_allclose(np.asarray(out_bf16), np.asarray(ref),
                               rtol=5e-2, atol=5e-2)

    print("KERNEL_OK")
</pallas_src>

<mosaic_0001>
module attributes {stable_mosaic.version = 11 : i64} {
  func.func @_conv_bias_relu_kernel(%arg0: i32, %arg1: i32, %arg2: memref<1x18x18x4xf32, #tpu.memory_space<vmem>>, %arg3: memref<36x128xf32, #tpu.memory_space<vmem>>, %arg4: memref<1x128xf32, #tpu.memory_space<vmem>>, %arg5: memref<1x16x16x128xf32, #tpu.memory_space<vmem>>) attributes {dimension_semantics = [#tpu.dimension_semantics<parallel>, #tpu.dimension_semantics<parallel>], iteration_bounds = array<i64: 2, 1>, scalar_prefetch = 0 : i64, scratch_operands = 0 : i64, tpu.core_type = #tpu.core_type<tc>, window_params = [{transform_indices = @transform_0, window_bounds = array<i64: 1, 18, 18, 4>}, {pipeline_mode = #tpu.pipeline_mode<synchronous>, transform_indices = @transform_1, window_bounds = array<i64: 36, 128>}, {pipeline_mode = #tpu.pipeline_mode<synchronous>, transform_indices = @transform_2, window_bounds = array<i64: 1, 128>}, {transform_indices = @transform_3, window_bounds = array<i64: 1, 16, 16, 128>}]} {
    %c16_i32 = arith.constant 16 : i32
    %0 = arith.muli %arg1, %c16_i32 : i32
    %1 = tpu.assume_multiple %0, 16 : i32
    %c0 = arith.constant 0 : index
    %2 = arith.index_cast %1 : i32 to index
    %c0_0 = arith.constant 0 : index
    %c0_1 = arith.constant 0 : index
    %3 = vector.load %arg2[%c0, %2, %c0_0, %c0_1] : memref<1x18x18x4xf32, #tpu.memory_space<vmem>>, vector<1x18x18x4xf32>
    %4 = vector.shape_cast %3 : vector<1x18x18x4xf32> to vector<18x18x4xf32>
    %5 = vector.extract_strided_slice %4 {offsets = [0, 0, 0], sizes = [16, 16, 4], strides = [1, 1, 1]} : vector<18x18x4xf32> to vector<16x16x4xf32>
    %6 = vector.extract_strided_slice %4 {offsets = [0, 1, 0], sizes = [16, 16, 4], strides = [1, 1, 1]} : vector<18x18x4xf32> to vector<16x16x4xf32>
    %7 = vector.extract_strided_slice %4 {offsets = [0, 2, 0], sizes = [16, 16, 4], strides = [1, 1, 1]} : vector<18x18x4xf32> to vector<16x16x4xf32>
    %8 = vector.extract_strided_slice %4 {offsets = [1, 0, 0], sizes = [16, 16, 4], strides = [1, 1, 1]} : vector<18x18x4xf32> to vector<16x16x4xf32>
    %9 = vector.extract_strided_slice %4 {offsets = [1, 1, 0], sizes = [16, 16, 4], strides = [1, 1, 1]} : vector<18x18x4xf32> to vector<16x16x4xf32>
    %10 = vector.extract_strided_slice %4 {offsets = [1, 2, 0], sizes = [16, 16, 4], strides = [1, 1, 1]} : vector<18x18x4xf32> to vector<16x16x4xf32>
    %11 = vector.extract_strided_slice %4 {offsets = [2, 0, 0], sizes = [16, 16, 4], strides = [1, 1, 1]} : vector<18x18x4xf32> to vector<16x16x4xf32>
    %12 = vector.extract_strided_slice %4 {offsets = [2, 1, 0], sizes = [16, 16, 4], strides = [1, 1, 1]} : vector<18x18x4xf32> to vector<16x16x4xf32>
    %13 = vector.extract_strided_slice %4 {offsets = [2, 2, 0], sizes = [16, 16, 4], strides = [1, 1, 1]} : vector<18x18x4xf32> to vector<16x16x4xf32>
    %14 = tpu.concatenate %5, %6, %7, %8, %9, %10, %11, %12, %13 in 2 : vector<16x16x4xf32>, vector<16x16x4xf32>, vector<16x16x4xf32>, vector<16x16x4xf32>, vector<16x16x4xf32>, vector<16x16x4xf32>, vector<16x16x4xf32>, vector<16x16x4xf32>, vector<16x16x4xf32> -> vector<16x16x36xf32>
    %15 = vector.shape_cast %14 : vector<16x16x36xf32> to vector<256x36xf32>
    %c0_2 = arith.constant 0 : index
    %c0_3 = arith.constant 0 : index
    %16 = vector.load %arg3[%c0_2, %c0_3] : memref<36x128xf32, #tpu.memory_space<vmem>>, vector<36x128xf32>
    %cst = arith.constant dense<0.000000e+00> : vector<256x128xf32>
    %17 = tpu.matmul %15, %16, %cst {dimension_numbers = #tpu.dot_dimension_numbers<[1], [0], [0], [1], [0, 0, 1, 1], [], []>} : vector<256x36xf32>, vector<36x128xf32>, vector<256x128xf32> -> vector<256x128xf32>
    %c0_4 = arith.constant 0 : index
    %c0_5 = arith.constant 0 : index
    %18 = vector.load %arg4[%c0_4, %c0_5] : memref<1x128xf32, #tpu.memory_space<vmem>>, vector<1x128xf32>
    %19 = vector.broadcast %18 : vector<1x128xf32> to vector<256x128xf32>
    %20 = arith.addf %17, %19 : vector<256x128xf32>
    %cst_6 = arith.constant 0.000000e+00 : f32
    %21 = vector.broadcast %cst_6 : f32 to vector<256x128xf32>
    %22 = arith.maximumf %20, %21 : vector<256x128xf32>
    %23 = vector.shape_cast %22 : vector<256x128xf32> to vector<16x16x128xf32>
    %c0_7 = arith.constant 0 : index
    %c0_8 = arith.constant 0 : index
    %c0_9 = arith.constant 0 : index
    %c0_10 = arith.constant 0 : index
    %24 = vector.load %arg5[%c0_7, %c0_8, %c0_9, %c0_10] : memref<1x16x16x128xf32, #tpu.memory_space<vmem>>, vector<1x16x16x128xf32>
    %25 = vector.shape_cast %24 : vector<1x16x16x128xf32> to vector<16x16x128xf32>
    %26 = vector.shape_cast %23 : vector<16x16x128xf32> to vector<1x16x16x128xf32>
    tpu.vector_store %arg5[%c0_7, %c0_8, %c0_9, %c0_10], %26 {strides = array<i32>} : memref<1x16x16x128xf32, #tpu.memory_space<vmem>>, vector<1x16x16x128xf32>,
    return
  }
  func.func @transform_0(%arg0: i32, %arg1: i32) -> (i32, i32, i32, i32) {
    %c0_i32 = arith.constant 0 : i32
    %c0_i32_0 = arith.constant 0 : i32
    %c0_i32_1 = arith.constant 0 : i32
    %c0_i32_2 = arith.constant 0 : i32
    return %arg0, %c0_i32, %c0_i32_0, %c0_i32_1 : i32, i32, i32, i32
  }
  func.func @transform_1(%arg0: i32, %arg1: i32) -> (i32, i32) {
    %c0_i32 = arith.constant 0 : i32
    %c0_i32_0 = arith.constant 0 : i32
    %c0_i32_1 = arith.constant 0 : i32
    return %c0_i32, %c0_i32_0 : i32, i32
  }
  func.func @transform_2(%arg0: i32, %arg1: i32) -> (i32, i32) {
    %c0_i32 = arith.constant 0 : i32
    %c0_i32_0 = arith.constant 0 : i32
    %c0_i32_1 = arith.constant 0 : i32
    return %c0_i32, %c0_i32_0 : i32, i32
  }
  func.func @transform_3(%arg0: i32, %arg1: i32) -> (i32, i32, i32, i32) {
    %c0_i32 = arith.constant 0 : i32
    %c0_i32_0 = arith.constant 0 : i32
    %c0_i32_1 = arith.constant 0 : i32
    return %arg0, %arg1, %c0_i32, %c0_i32_0 : i32, i32, i32, i32
  }
}

</mosaic_0001>

<llo_original>
// kernel: tpu_custom_call.1
$region0: #{tpu_custom_call.1}
  #allocation0 [shape = 'u32[]', space=smem, size = 0x4, offset = 0x4, fixed_abs, tag = 'smem constant byte address 0x4 - core index']
  #allocation1 [shape = 'u32[144,128]{1,0:T(1,128)}', space=vmem, size = 0x12000, scoped, tag = 'internal scratch']
  %s0 = inlined_call_operand.vmem [shape: f32[2,18,18,4], index: 0, kind: input, shape index: {}]
  %s1 = inlined_call_operand.vmem [shape: f32[36,128], index: 1, kind: input, shape index: {}]
  %s2 = inlined_call_operand.vmem [shape: f32[1,128], index: 2, kind: input, shape index: {}]
  %s3 = inlined_call_operand.hbm [shape: f32[2,16,16,128], index: 3, kind: output, shape index: {}]
  %s4 = sld [smem:[#allocation0]]
  $region45: #{tpu_custom_call.1} parent=0
    _
  %s6 = ssub.s32 1, %s4
  %s7 = scalar_select 0, %s6, %s4
  $region1: #{tpu_custom_call.1} parent=0
    #allocation2 [shape = 'u8[262144]{0}', space=vmem, size = 0x40000, scoped, tag = 'output window, operand 0']
    #allocation3 [shape = 's32[2]{0}', space=sflag, size = 0x8, scoped, tag = 'scoped memory for tpu_custom_call.1']
    %8 = vsyncpa [#allocation3], 0
    %s9 = scalar_lea.sflag [#allocation3], 1
    %10 = vsyncpa %s9, 0
    loop: start=0, step=1, limit=4
    $region2: #{tpu_custom_call.1} parent=1 // loop_pre_header
      _
    $region3: #{tpu_custom_call.1} parent=1 // loop_header
      %s12 = sphi 0, %s16
      %p13 = scmp.ge.s32.totalorder %s12, 4
      %s19 = sphi 0, %s31
      %s20 = sphi 0, %s27
      %s21 = sphi 0, %s19
      %s22 = sphi 0, %s20
      %s23 = sphi 0, %s21
      %s24 = sphi 0, %s22
      %s34 = sphi 0, %s36
      %s37 = sphi 0, %s34
      %s38 = sphi 0, %s37
      %s54 = sphi 0, %s38
      %s58 = sphi 0, %s58
      %s60 = sphi 0, %s58
      %s61 = sphi 0, %s60
      %s75 = sphi 0, %s61
      %s79 = sphi 0, %s79
      %s81 = sphi 0, %s79
      %s82 = sphi 0, %s81
      %s96 = sphi 0, %s82
      %s104 = sphi 0, %s106
      %s107 = sphi 0, %s104
      %s108 = sphi 0, %s107
      %s124 = sphi 0, %s108
    $region4: #{tpu_custom_call.1} parent=1 // loop_header_branch
      %15 = sbr.rel (%p13) target = $region8
    $region5: #{tpu_custom_call.1} parent=1 // loop_body
      %s17 = ssub.s32 %s12, 1
      %s18 = ssub.s32 %s12, 2
      %s25 = sadd.s32 1, %s20
      %p26 = scmp.ge.s32.totalorder %s25, 1
      %s27 = scalar_select %p26, 0, %s25
      %s28 = sadd.s32 1, %s19
      %s29 = scalar_select %p26, %s28, %s19
      %p30 = scmp.ge.s32.totalorder %s29, 2
      %s31 = scalar_select %p30, 0, %s29
      %s32 = ssub.s32 %s19, %s31
      %p33 = scmp.eq.s32.totalorder %s32, 0
      %s35 = sadd.s32 %s34, 1
      %s36 = scalar_select %p33, %s34, %s35
      %p39 = pneg %p33
      %p40 = scmp.eq.s32.totalorder %s12, 1
      %p41 = por %p39, %p40
      %p42 = scmp.ne.s32.totalorder %s34, %s37
      %p43 = scmp.eq.s32.totalorder %s12, 0
      %p44 = por %p42, %p43
      %p45 = scmp.ne.s32.totalorder %s34, %s37
      %p46 = scmp.eq.s32.totalorder %s17, 1
      %p47 = por %p45, %p46
      %p48 = scmp.ne.s32.totalorder %s37, %s38
      %p49 = scmp.eq.s32.totalorder %s17, 0
      %p50 = por %p48, %p49
      %p51 = scmp.ne.s32.totalorder %s37, %s38
      %p52 = scmp.eq.s32.totalorder %s18, 1
      %p53 = por %p51, %p52
      %p55 = scmp.ne.s32.totalorder %s38, %s54
      %p56 = scmp.eq.s32.totalorder %s18, 0
      %p57 = por %p55, %p56
      %s59 = sadd.s32 %s58, 1
      %p62 = scmp.eq.s32.totalorder %s12, 1
      %p63 = scmp.ne.s32.totalorder %s58, %s60
      %p64 = scmp.eq.s32.totalorder %s12, 0
      %p65 = por %p63, %p64
      %p66 = scmp.ne.s32.totalorder %s58, %s60
      %p67 = scmp.eq.s32.totalorder %s17, 1
      %p68 = por %p66, %p67
      %p69 = scmp.ne.s32.totalorder %s60, %s61
      %p70 = scmp.eq.s32.totalorder %s17, 0
      %p71 = por %p69, %p70
      %p72 = scmp.ne.s32.totalorder %s60, %s61
      %p73 = scmp.eq.s32.totalorder %s18, 1
      %p74 = por %p72, %p73
      %p76 = scmp.ne.s32.totalorder %s61, %s75
      %p77 = scmp.eq.s32.totalorder %s18, 0
      %p78 = por %p76, %p77
      %s80 = sadd.s32 %s79, 1
      %p83 = scmp.eq.s32.totalorder %s12, 1
      %p84 = scmp.ne.s32.totalorder %s79, %s81
      %p85 = scmp.eq.s32.totalorder %s12, 0
      %p86 = por %p84, %p85
      %p87 = scmp.ne.s32.totalorder %s79, %s81
      %p88 = scmp.eq.s32.totalorder %s17, 1
      %p89 = por %p87, %p88
      %p90 = scmp.ne.s32.totalorder %s81, %s82
      %p91 = scmp.eq.s32.totalorder %s17, 0
      %p92 = por %p90, %p91
      %p93 = scmp.ne.s32.totalorder %s81, %s82
      %p94 = scmp.eq.s32.totalorder %s18, 1
      %p95 = por %p93, %p94
      %p97 = scmp.ne.s32.totalorder %s82, %s96
      %p98 = scmp.eq.s32.totalorder %s18, 0
      %p99 = por %p97, %p98
      %s100 = ssub.s32 %s19, %s31
      %s101 = ssub.s32 %s20, %s27
      %s102 = sor.u32 %s100, %s101
      %p103 = scmp.eq.s32.totalorder %s102, 0
      %s105 = sadd.s32 %s104, 1
      %s106 = scalar_select %p103, %s104, %s105
      %p109 = pneg %p103
      %p110 = scmp.eq.s32.totalorder %s12, 1
      %p111 = por %p109, %p110
      %p112 = scmp.ne.s32.totalorder %s104, %s107
      %p113 = scmp.eq.s32.totalorder %s12, 0
      %p114 = por %p112, %p113
      %p115 = scmp.ne.s32.totalorder %s104, %s107
      %p116 = scmp.eq.s32.totalorder %s17, 1
      %p117 = por %p115, %p116
      %p118 = scmp.ne.s32.totalorder %s107, %s108
      %p119 = scmp.eq.s32.totalorder %s17, 0
      %p120 = por %p118, %p119
      %p121 = scmp.ne.s32.totalorder %s107, %s108
      %p122 = scmp.eq.s32.totalorder %s18, 1
      %p123 = por %p121, %p122
      %p125 = scmp.ne.s32.totalorder %s108, %s124
      %p126 = scmp.eq.s32.totalorder %s18, 0
      %p127 = por %p125, %p126
      %p128 = scmp.le.s32.totalorder 1, %s12
      %p129 = scmp.lt.s32.totalorder %s12, 3
      %p130 = pnand %p128, %p129
      %p131 = pneg %p130
      // Predicated region
      $region9: #{tpu_custom_call.1} parent=5 // pred_check
        _
      $region10: #{tpu_custom_call.1} parent=5 // pred_check_branch
        %133 = sbr.rel (%p130) target = $region12
      $region11: #{tpu_custom_call.1} parent=5 // pred_region
        %s134 = ssub.s32 %s12, 1
        // Predicated region
        $region13: #{tpu_custom_call.1} parent=11 // pred_check
          %p135 = pneg %p71
        $region14: #{tpu_custom_call.1} parent=11 // pred_check_branch
          %137 = sbr.rel (%p135) target = $region16
        $region15: #{tpu_custom_call.1} parent=11 // pred_region
          _
        $region16: #{tpu_custom_call.1} parent=11 // pred_fallthru
          _
        // Predicated region
        $region17: #{tpu_custom_call.1} parent=11 // pred_check
          %p138 = pneg %p92
        $region18: #{tpu_custom_call.1} parent=11 // pred_check_branch
          %140 = sbr.rel (%p138) target = $region20
        $region19: #{tpu_custom_call.1} parent=11 // pred_region
          _
        $region20: #{tpu_custom_call.1} parent=11 // pred_fallthru
          _
      $region12: #{tpu_custom_call.1} parent=5 // pred_fallthru
        _
      %p141 = scmp.lt.s32.totalorder %s12, 2
      // Predicated region
      $region21: #{tpu_custom_call.1} parent=5 // pred_check
        %p142 = pneg %p141
      $region22: #{tpu_custom_call.1} parent=5 // pred_check_branch
        %144 = sbr.rel (%p142) target = $region24
      $region23: #{tpu_custom_call.1} parent=5 // pred_region
        // Predicated region
        $region25: #{tpu_custom_call.1} parent=23 // pred_check
          %p145 = pneg %p44
        $region26: #{tpu_custom_call.1} parent=23 // pred_check_branch
          %147 = sbr.rel (%p145) target = $region28
        $region27: #{tpu_custom_call.1} parent=23 // pred_region
          %p148 = scmp.lt.s32.totalorder %s19, 1
          %s149 = scalar_select %p148, %s19, 1
          %s150 = smul.addr %s149, 54
          %s151 = smul.addr %s150, 8
          %s152 = scalar_lea.vmem %s0, %s151
        $region28: #{tpu_custom_call.1} parent=23 // pred_fallthru
          _
      $region24: #{tpu_custom_call.1} parent=5 // pred_fallthru
        _
      %p153 = scmp.le.s32.totalorder 1, %s12
      %p154 = scmp.lt.s32.totalorder %s12, 3
      %p155 = pnand %p153, %p154
      %p156 = pneg %p155
      // Predicated region
      $region29: #{tpu_custom_call.1} parent=5 // pred_check
        _
      $region30: #{tpu_custom_call.1} parent=5 // pred_check_branch
        %158 = sbr.rel (%p155) target = $region32
      $region31: #{tpu_custom_call.1} parent=5 // pred_region
        %s159 = ssub.s32 %s12, 1
        %p160 = scmp.lt.s32.totalorder %s21, 1
        %s161 = scalar_select %p160, %s21, 1
        %s162 = smul.addr %s161, 54
        %s163 = smul.addr %s162, 8
        %s164 = scalar_lea.vmem %s0, %s163
        %p165 = pneg %p50
        %p166 = pneg %p47
        %p167 = pneg %p71
        %p168 = pneg %p68
        %p169 = pneg %p92
        %p170 = pneg %p89
        %p171 = pneg %p120
        %p172 = pneg %p117
        %s173 = sand.u32 %s107, 1
        %s174 = scalar_lea.sflag [#allocation3], %s173
        %s175 = sand.u32 %s107, 1
        %s176 = smul.addr %s175, 256
        %s177 = scalar_lea.vmem [#allocation2], %s176
        %p178 = scmp.lt.s32.totalorder %s21, 1
        %s179 = scalar_select %p178, %s21, 1
        %s180 = smul.addr %s179, 54
        %s181 = smul.addr %s180, 8
        %s182 = scalar_lea.vmem %s0, %s181
        %s183 = smul.u32 16, %s22
        %s184 = smul.u32 %s22, 16
        %s185 = smul.u32 %s184, 24
        %s186 = scalar_lea.vmem %s182, %s185
        %v187 = vld [vmem:[%s186] sm:$0xff]
        %v188 = vld [vmem:[%s186 + $0x8] sm:$0xff]
        %v189 = vld [vmem:[%s186 + $0x10] sm:$0x3]
        %v190 = vld [vmem:[%s186 + $0x18] sm:$0xff]
        %v191 = vld [vmem:[%s186 + $0x20] sm:$0xff]
        %v192 = vld [vmem:[%s186 + $0x28] sm:$0x3]
        %v193 = vld [vmem:[%s186 + $0x30] sm:$0xff]
        %v194 = vld [vmem:[%s186 + $0x38] sm:$0xff]
        %v195 = vld [vmem:[%s186 + $0x40] sm:$0x3]
        %v196 = vld [vmem:[%s186 + $0x48] sm:$0xff]
        %v197 = vld [vmem:[%s186 + $0x50] sm:$0xff]
        %v198 = vld [vmem:[%s186 + $0x58] sm:$0x3]
        %v199 = vld [vmem:[%s186 + $0x60] sm:$0xff]
        %v200 = vld [vmem:[%s186 + $0x68] sm:$0xff]
        %v201 = vld [vmem:[%s186 + $0x70] sm:$0x3]
        %v202 = vld [vmem:[%s186 + $0x78] sm:$0xff]
        %v203 = vld [vmem:[%s186 + $0x80] sm:$0xff]
        %v204 = vld [vmem:[%s186 + $0x88] sm:$0x3]
        %v205 = vld [vmem:[%s186 + $0x90] sm:$0xff]
        %v206 = vld [vmem:[%s186 + $0x98] sm:$0xff]
        %v207 = vld [vmem:[%s186 + $0xa0] sm:$0x3]
        %v208 = vld [vmem:[%s186 + $0xa8] sm:$0xff]
        %v209 = vld [vmem:[%s186 + $0xb0] sm:$0xff]
        %v210 = vld [vmem:[%s186 + $0xb8] sm:$0x3]
        %v211 = vld [vmem:[%s186 + $0xc0] sm:$0xff]
        %v212 = vld [vmem:[%s186 + $0xc8] sm:$0xff]
        %v213 = vld [vmem:[%s186 + $0xd0] sm:$0x3]
        %v214 = vld [vmem:[%s186 + $0xd8] sm:$0xff]
        %v215 = vld [vmem:[%s186 + $0xe0] sm:$0xff]
        %v216 = vld [vmem:[%s186 + $0xe8] sm:$0x3]
        %v217 = vld [vmem:[%s186 + $0xf0] sm:$0xff]
        %v218 = vld [vmem:[%s186 + $0xf8] sm:$0xff]
        %v219 = vld [vmem:[%s186 + $0x100] sm:$0x3]
        %v220 = vld [vmem:[%s186 + $0x108] sm:$0xff]
        %v221 = vld [vmem:[%s186 + $0x110] sm:$0xff]
        %v222 = vld [vmem:[%s186 + $0x118] sm:$0x3]
        %v223 = vld [vmem:[%s186 + $0x120] sm:$0xff]
        %v224 = vld [vmem:[%s186 + $0x128] sm:$0xff]
        %v225 = vld [vmem:[%s186 + $0x130] sm:$0x3]
        %v226 = vld [vmem:[%s186 + $0x138] sm:$0xff]
        %v227 = vld [vmem:[%s186 + $0x140] sm:$0xff]
        %v228 = vld [vmem:[%s186 + $0x148] sm:$0x3]
        %v229 = vld [vmem:[%s186 + $0x150] sm:$0xff]
        %v230 = vld [vmem:[%s186 + $0x158] sm:$0xff]
        %v231 = vld [vmem:[%s186 + $0x160] sm:$0x3]
        %v232 = vld [vmem:[%s186 + $0x168] sm:$0xff]
        %v233 = vld [vmem:[%s186 + $0x170] sm:$0xff]
        %v234 = vld [vmem:[%s186 + $0x178] sm:$0x3]
        %v235 = vld [vmem:[%s186 + $0x180] sm:$0xff]
        %v236 = vld [vmem:[%s186 + $0x188] sm:$0xff]
        %v237 = vld [vmem:[%s186 + $0x190] sm:$0x3]
        %v238 = vld [vmem:[%s186 + $0x198] sm:$0xff]
        %v239 = vld [vmem:[%s186 + $0x1a0] sm:$0xff]
        %v240 = vld [vmem:[%s186 + $0x1a8] sm:$0x3]
        %vm289 = vcmask 1046528
        %v290 = vrot.slane %v187, 1
        %v291 = vrot.slane %v188, 1
        %v292 = vsel %vm289, %v290, %v291
        %v293 = vrot.slane %v189, 1
        %v294 = vsel %vm289, %v291, %v293
        %v295 = vrot.slane %v190, 1
        %v296 = vrot.slane %v191, 1
        %v297 = vsel %vm289, %v295, %v296
        %v298 = vrot.slane %v192, 1
        %v299 = vsel %vm289, %v296, %v298
        %v300 = vrot.slane %v193, 1
        %v301 = vrot.slane %v194, 1
        %v302 = vsel %vm289, %v300, %v301
        %v303 = vrot.slane %v195, 1
        %v304 = vsel %vm289, %v301, %v303
        %v305 = vrot.slane %v196, 1
        %v306 = vrot.slane %v197, 1
        %v307 = vsel %vm289, %v305, %v306
        %v308 = vrot.slane %v198, 1
        %v309 = vsel %vm289, %v306, %v308
        %v310 = vrot.slane %v199, 1
        %v311 = vrot.slane %v200, 1
        %v312 = vsel %vm289, %v310, %v311
        %v313 = vrot.slane %v201, 1
        %v314 = vsel %vm289, %v311, %v313
        %v315 = vrot.slane %v202, 1
        %v316 = vrot.slane %v203, 1
        %v317 = vsel %vm289, %v315, %v316
        %v318 = vrot.slane %v204, 1
        %v319 = vsel %vm289, %v316, %v318
        %v320 = vrot.slane %v205, 1
        %v321 = vrot.slane %v206, 1
        %v322 = vsel %vm289, %v320, %v321
        %v323 = vrot.slane %v207, 1
        %v324 = vsel %vm289, %v321, %v323
        %v325 = vrot.slane %v208, 1
        %v326 = vrot.slane %v209, 1
        %v327 = vsel %vm289, %v325, %v326
        %v328 = vrot.slane %v210, 1
        %v329 = vsel %vm289, %v326, %v328
        %v330 = vrot.slane %v211, 1
        %v331 = vrot.slane %v212, 1
        %v332 = vsel %vm289, %v330, %v331
        %v333 = vrot.slane %v213, 1
        %v334 = vsel %vm289, %v331, %v333
        %v335 = vrot.slane %v214, 1
        %v336 = vrot.slane %v215, 1
        %v337 = vsel %vm289, %v335, %v336
        %v338 = vrot.slane %v216, 1
        %v339 = vsel %vm289, %v336, %v338
        %v340 = vrot.slane %v217, 1
        %v341 = vrot.slane %v218, 1
        %v342 = vsel %vm289, %v340, %v341
        %v343 = vrot.slane %v219, 1
        %v344 = vsel %vm289, %v341, %v343
        %v345 = vrot.slane %v220, 1
        %v346 = vrot.slane %v221, 1
        %v347 = vsel %vm289, %v345, %v346
        %v348 = vrot.slane %v222, 1
        %v349 = vsel %vm289, %v346, %v348
        %v350 = vrot.slane %v223, 1
        %v351 = vrot.slane %v224, 1
        %v352 = vsel %vm289, %v350, %v351
        %v353 = vrot.slane %v225, 1
        %v354 = vsel %vm289, %v351, %v353
        %v355 = vrot.slane %v226, 1
        %v356 = vrot.slane %v227, 1
        %v357 = vsel %vm289, %v355, %v356
        %v358 = vrot.slane %v228, 1
        %v359 = vsel %vm289, %v356, %v358
        %v360 = vrot.slane %v229, 1
        %v361 = vrot.slane %v230, 1
        %v362 = vsel %vm289, %v360, %v361
        %v363 = vrot.slane %v231, 1
        %v364 = vsel %vm289, %v361, %v363
        %v365 = vrot.slane %v232, 1
        %v366 = vrot.slane %v233, 1
        %v367 = vsel %vm289, %v365, %v366
        %v368 = vrot.slane %v234, 1
        %v369 = vsel %vm289, %v366, %v368
        %370 = vrot.lane.b32.xlu0 %v292, 4
        %v371 = vpop.permute.xlu0 %370
        %372 = vrot.lane.b32.xlu0 %v294, 4
        %v373 = vpop.permute.xlu0 %372
        %374 = vrot.lane.b32.xlu0 %v297, 4
        %v375 = vpop.permute.xlu0 %374
        %376 = vrot.lane.b32.xlu0 %v299, 4
        %v377 = vpop.permute.xlu0 %376
        %378 = vrot.lane.b32.xlu0 %v302, 4
        %v379 = vpop.permute.xlu0 %378
        %380 = vrot.lane.b32.xlu0 %v304, 4
        %v381 = vpop.permute.xlu0 %380
        %382 = vrot.lane.b32.xlu0 %v307, 4
        %v383 = vpop.permute.xlu0 %382
        %384 = vrot.lane.b32.xlu0 %v309, 4
        %v385 = vpop.permute.xlu0 %384
        %386 = vrot.lane.b32.xlu0 %v312, 4
        %v387 = vpop.permute.xlu0 %386
        %388 = vrot.lane.b32.xlu0 %v314, 4
        %v389 = vpop.permute.xlu0 %388
        %390 = vrot.lane.b32.xlu0 %v317, 4
        %v391 = vpop.permute.xlu0 %390
        %392 = vrot.lane.b32.xlu0 %v319, 4
        %v393 = vpop.permute.xlu0 %392
        %394 = vrot.lane.b32.xlu0 %v322, 4
        %v395 = vpop.permute.xlu0 %394
        %396 = vrot.lane.b32.xlu0 %v324, 4
        %v397 = vpop.permute.xlu0 %396
        %398 = vrot.lane.b32.xlu0 %v327, 4
        %v399 = vpop.permute.xlu0 %398
        %400 = vrot.lane.b32.xlu0 %v329, 4
        %v401 = vpop.permute.xlu0 %400
        %402 = vrot.lane.b32.xlu0 %v332, 4
        %v403 = vpop.permute.xlu0 %402
        %404 = vrot.lane.b32.xlu0 %v334, 4
        %v405 = vpop.permute.xlu0 %404
        %406 = vrot.lane.b32.xlu0 %v337, 4
        %v407 = vpop.permute.xlu0 %406
        %408 = vrot.lane.b32.xlu0 %v339, 4
        %v409 = vpop.permute.xlu0 %408
        %410 = vrot.lane.b32.xlu0 %v342, 4
        %v411 = vpop.permute.xlu0 %410
        %412 = vrot.lane.b32.xlu0 %v344, 4
        %v413 = vpop.permute.xlu0 %412
        %414 = vrot.lane.b32.xlu0 %v347, 4
        %v415 = vpop.permute.xlu0 %414
        %416 = vrot.lane.b32.xlu0 %v349, 4
        %v417 = vpop.permute.xlu0 %416
        %418 = vrot.lane.b32.xlu0 %v352, 4
        %v419 = vpop.permute.xlu0 %418
        %420 = vrot.lane.b32.xlu0 %v354, 4
        %v421 = vpop.permute.xlu0 %420
        %422 = vrot.lane.b32.xlu0 %v357, 4
        %v423 = vpop.permute.xlu0 %422
        %424 = vrot.lane.b32.xlu0 %v359, 4
        %v425 = vpop.permute.xlu0 %424
        %426 = vrot.lane.b32.xlu0 %v362, 4
        %v427 = vpop.permute.xlu0 %426
        %428 = vrot.lane.b32.xlu0 %v364, 4
        %v429 = vpop.permute.xlu0 %428
        %430 = vrot.lane.b32.xlu0 %v367, 4
        %v431 = vpop.permute.xlu0 %430
        %432 = vrot.lane.b32.xlu0 %v369, 4
        %v433 = vpop.permute.xlu0 %432
        %vm466 = vcmask 1045504
        %v467 = vrot.slane %v187, 2
        %v468 = vrot.slane %v188, 2
        %v469 = vsel %vm466, %v467, %v468
        %v470 = vrot.slane %v189, 2
        %v471 = vsel %vm466, %v468, %v470
        %v472 = vrot.slane %v190, 2
        %v473 = vrot.slane %v191, 2
        %v474 = vsel %vm466, %v472, %v473
        %v475 = vrot.slane %v192, 2
        %v476 = vsel %vm466, %v473, %v475
        %v477 = vrot.slane %v193, 2
        %v478 = vrot.slane %v194, 2
        %v479 = vsel %vm466, %v477, %v478
        %v480 = vrot.slane %v195, 2
        %v481 = vsel %vm466, %v478, %v480
        %v482 = vrot.slane %v196, 2
        %v483 = vrot.slane %v197, 2
        %v484 = vsel %vm466, %v482, %v483
        %v485 = vrot.slane %v198, 2
        %v486 = vsel %vm466, %v483, %v485
        %v487 = vrot.slane %v199, 2
        %v488 = vrot.slane %v200, 2
        %v489 = vsel %vm466, %v487, %v488
        %v490 = vrot.slane %v201, 2
        %v491 = vsel %vm466, %v488, %v490
        %v492 = vrot.slane %v202, 2
        %v493 = vrot.slane %v203, 2
        %v494 = vsel %vm466, %v492, %v493
        %v495 = vrot.slane %v204, 2
        %v496 = vsel %vm466, %v493, %v495
        %v497 = vrot.slane %v205, 2
        %v498 = vrot.slane %v206, 2
        %v499 = vsel %vm466, %v497, %v498
        %v500 = vrot.slane %v207, 2
        %v501 = vsel %vm466, %v498, %v500
        %v502 = vrot.slane %v208, 2
        %v503 = vrot.slane %v209, 2
        %v504 = vsel %vm466, %v502, %v503
        %v505 = vrot.slane %v210, 2
        %v506 = vsel %vm466, %v503, %v505
        %v507 = vrot.slane %v211, 2
        %v508 = vrot.slane %v212, 2
        %v509 = vsel %vm466, %v507, %v508
        %v510 = vrot.slane %v213, 2
        %v511 = vsel %vm466, %v508, %v510
        %v512 = vrot.slane %v214, 2
        %v513 = vrot.slane %v215, 2
        %v514 = vsel %vm466, %v512, %v513
        %v515 = vrot.slane %v216, 2
        %v516 = vsel %vm466, %v513, %v515
        %v517 = vrot.slane %v217, 2
        %v518 = vrot.slane %v218, 2
        %v519 = vsel %vm466, %v517, %v518
        %v520 = vrot.slane %v219, 2
        %v521 = vsel %vm466, %v518, %v520
        %v522 = vrot.slane %v220, 2
        %v523 = vrot.slane %v221, 2
        %v524 = vsel %vm466, %v522, %v523
        %v525 = vrot.slane %v222, 2
        %v526 = vsel %vm466, %v523, %v525
        %v527 = vrot.slane %v223, 2
        %v528 = vrot.slane %v224, 2
        %v529 = vsel %vm466, %v527, %v528
        %v530 = vrot.slane %v225, 2
        %v531 = vsel %vm466, %v528, %v530
        %v532 = vrot.slane %v226, 2
        %v533 = vrot.slane %v227, 2
        %v534 = vsel %vm466, %v532, %v533
        %v535 = vrot.slane %v228, 2
        %v536 = vsel %vm466, %v533, %v535
        %v537 = vrot.slane %v229, 2
        %v538 = vrot.slane %v230, 2
        %v539 = vsel %vm466, %v537, %v538
        %v540 = vrot.slane %v231, 2
        %v541 = vsel %vm466, %v538, %v540
        %v542 = vrot.slane %v232, 2
        %v543 = vrot.slane %v233, 2
        %v544 = vsel %vm466, %v542, %v543
        %v545 = vrot.slane %v234, 2
        %v546 = vsel %vm466, %v543, %v545
        %547 = vrot.lane.b32.xlu0 %v469, 8
        %v548 = vpop.permute.xlu0 %547
        %549 = vrot.lane.b32.xlu0 %v471, 8
        %v550 = vpop.permute.xlu0 %549
        %551 = vrot.lane.b32.xlu0 %v474, 8
        %v552 = vpop.permute.xlu0 %551
        %553 = vrot.lane.b32.xlu0 %v476, 8
        %v554 = vpop.permute.xlu0 %553
        %555 = vrot.lane.b32.xlu0 %v479, 8
        %v556 = vpop.permute.xlu0 %555
        %557 = vrot.lane.b32.xlu0 %v481, 8
        %v558 = vpop.permute.xlu0 %557
        %559 = vrot.lane.b32.xlu0 %v484, 8
        %v560 = vpop.permute.xlu0 %559
        %561 = vrot.lane.b32.xlu0 %v486, 8
        %v562 = vpop.permute.xlu0 %561
        %563 = vrot.lane.b32.xlu0 %v489, 8
        %v564 = vpop.permute.xlu0 %563
        %565 = vrot.lane.b32.xlu0 %v491, 8
        %v566 = vpop.permute.xlu0 %565
        %567 = vrot.lane.b32.xlu0 %v494, 8
        %v568 = vpop.permute.xlu0 %567
        %569 = vrot.lane.b32.xlu0 %v496, 8
        %v570 = vpop.permute.xlu0 %569
        %571 = vrot.lane.b32.xlu0 %v499, 8
        %v572 = vpop.permute.xlu0 %571
        %573 = vrot.lane.b32.xlu0 %v501, 8
        %v574 = vpop.permute.xlu0 %573
        %575 = vrot.lane.b32.xlu0 %v504, 8
        %v576 = vpop.permute.xlu0 %575
        %577 = vrot.lane.b32.xlu0 %v506, 8
        %v578 = vpop.permute.xlu0 %577
        %579 = vrot.lane.b32.xlu0 %v509, 8
        %v580 = vpop.permute.xlu0 %579
        %581 = vrot.lane.b32.xlu0 %v511, 8
        %v582 = vpop.permute.xlu0 %581
        %583 = vrot.lane.b32.xlu0 %v514, 8
        %v584 = vpop.permute.xlu0 %583
        %585 = vrot.lane.b32.xlu0 %v516, 8
        %v586 = vpop.permute.xlu0 %585
        %587 = vrot.lane.b32.xlu0 %v519, 8
        %v588 = vpop.permute.xlu0 %587
        %589 = vrot.lane.b32.xlu0 %v521, 8
        %v590 = vpop.permute.xlu0 %589
        %591 = vrot.lane.b32.xlu0 %v524, 8
        %v592 = vpop.permute.xlu0 %591
        %593 = vrot.lane.b32.xlu0 %v526, 8
        %v594 = vpop.permute.xlu0 %593
        %595 = vrot.lane.b32.xlu0 %v529, 8
        %v596 = vpop.permute.xlu0 %595
        %597 = vrot.lane.b32.xlu0 %v531, 8
        %v598 = vpop.permute.xlu0 %597
        %599 = vrot.lane.b32.xlu0 %v534, 8
        %v600 = vpop.permute.xlu0 %599
        %601 = vrot.lane.b32.xlu0 %v536, 8
        %v602 = vpop.permute.xlu0 %601
        %603 = vrot.lane.b32.xlu0 %v539, 8
        %v604 = vpop.permute.xlu0 %603
        %605 = vrot.lane.b32.xlu0 %v541, 8
        %v606 = vpop.permute.xlu0 %605
        %607 = vrot.lane.b32.xlu0 %v544, 8
        %v608 = vpop.permute.xlu0 %607
        %609 = vrot.lane.b32.xlu0 %v546, 8
        %v610 = vpop.permute.xlu0 %609
        %645 = vrot.lane.b32.xlu0 %v190, 12
        %v646 = vpop.permute.xlu0 %645
        %647 = vrot.lane.b32.xlu0 %v191, 12
        %v648 = vpop.permute.xlu0 %647
        %649 = vrot.lane.b32.xlu0 %v193, 12
        %v650 = vpop.permute.xlu0 %649
        %651 = vrot.lane.b32.xlu0 %v194, 12
        %v652 = vpop.permute.xlu0 %651
        %653 = vrot.lane.b32.xlu0 %v196, 12
        %v654 = vpop.permute.xlu0 %653
        %655 = vrot.lane.b32.xlu0 %v197, 12
        %v656 = vpop.permute.xlu0 %655
        %657 = vrot.lane.b32.xlu0 %v199, 12
        %v658 = vpop.permute.xlu0 %657
        %659 = vrot.lane.b32.xlu0 %v200, 12
        %v660 = vpop.permute.xlu0 %659
        %661 = vrot.lane.b32.xlu0 %v202, 12
        %v662 = vpop.permute.xlu0 %661
        %663 = vrot.lane.b32.xlu0 %v203, 12
        %v664 = vpop.permute.xlu0 %663
        %665 = vrot.lane.b32.xlu0 %v205, 12
        %v666 = vpop.permute.xlu0 %665
        %667 = vrot.lane.b32.xlu0 %v206, 12
        %v668 = vpop.permute.xlu0 %667
        %669 = vrot.lane.b32.xlu0 %v208, 12
        %v670 = vpop.permute.xlu0 %669
        %671 = vrot.lane.b32.xlu0 %v209, 12
        %v672 = vpop.permute.xlu0 %671
        %673 = vrot.lane.b32.xlu0 %v211, 12
        %v674 = vpop.permute.xlu0 %673
        %675 = vrot.lane.b32.xlu0 %v212, 12
        %v676 = vpop.permute.xlu0 %675
        %677 = vrot.lane.b32.xlu0 %v214, 12
        %v678 = vpop.permute.xlu0 %677
        %679 = vrot.lane.b32.xlu0 %v215, 12
        %v680 = vpop.permute.xlu0 %679
        %681 = vrot.lane.b32.xlu0 %v217, 12
        %v682 = vpop.permute.xlu0 %681
        %683 = vrot.lane.b32.xlu0 %v218, 12
        %v684 = vpop.permute.xlu0 %683
        %685 = vrot.lane.b32.xlu0 %v220, 12
        %v686 = vpop.permute.xlu0 %685
        %687 = vrot.lane.b32.xlu0 %v221, 12
        %v688 = vpop.permute.xlu0 %687
        %689 = vrot.lane.b32.xlu0 %v223, 12
        %v690 = vpop.permute.xlu0 %689
        %691 = vrot.lane.b32.xlu0 %v224, 12
        %v692 = vpop.permute.xlu0 %691
        %693 = vrot.lane.b32.xlu0 %v226, 12
        %v694 = vpop.permute.xlu0 %693
        %695 = vrot.lane.b32.xlu0 %v227, 12
        %v696 = vpop.permute.xlu0 %695
        %697 = vrot.lane.b32.xlu0 %v229, 12
        %v698 = vpop.permute.xlu0 %697
        %699 = vrot.lane.b32.xlu0 %v230, 12
        %v700 = vpop.permute.xlu0 %699
        %701 = vrot.lane.b32.xlu0 %v232, 12
        %v702 = vpop.permute.xlu0 %701
        %703 = vrot.lane.b32.xlu0 %v233, 12
        %v704 = vpop.permute.xlu0 %703
        %705 = vrot.lane.b32.xlu0 %v235, 12
        %v706 = vpop.permute.xlu0 %705
        %707 = vrot.lane.b32.xlu0 %v236, 12
        %v708 = vpop.permute.xlu0 %707
        %v742 = vrot.slane %v235, 1
        %v743 = vrot.slane %v236, 1
        %v744 = vsel %vm289, %v742, %v743
        %v745 = vrot.slane %v237, 1
        %v746 = vsel %vm289, %v743, %v745
        %747 = vrot.lane.b32.xlu0 %v297, 16
        %v748 = vpop.permute.xlu0 %747
        %749 = vrot.lane.b32.xlu0 %v299, 16
        %v750 = vpop.permute.xlu0 %749
        %751 = vrot.lane.b32.xlu0 %v302, 16
        %v752 = vpop.permute.xlu0 %751
        %753 = vrot.lane.b32.xlu0 %v304, 16
        %v754 = vpop.permute.xlu0 %753
        %755 = vrot.lane.b32.xlu0 %v307, 16
        %v756 = vpop.permute.xlu0 %755
        %757 = vrot.lane.b32.xlu0 %v309, 16
        %v758 = vpop.permute.xlu0 %757
        %759 = vrot.lane.b32.xlu0 %v312, 16
        %v760 = vpop.permute.xlu0 %759
        %761 = vrot.lane.b32.xlu0 %v314, 16
        %v762 = vpop.permute.xlu0 %761
        %763 = vrot.lane.b32.xlu0 %v317, 16
        %v764 = vpop.permute.xlu0 %763
        %765 = vrot.lane.b32.xlu0 %v319, 16
        %v766 = vpop.permute.xlu0 %765
        %767 = vrot.lane.b32.xlu0 %v322, 16
        %v768 = vpop.permute.xlu0 %767
        %769 = vrot.lane.b32.xlu0 %v324, 16
        %v770 = vpop.permute.xlu0 %769
        %771 = vrot.lane.b32.xlu0 %v327, 16
        %v772 = vpop.permute.xlu0 %771
        %773 = vrot.lane.b32.xlu0 %v329, 16
        %v774 = vpop.permute.xlu0 %773
        %775 = vrot.lane.b32.xlu0 %v332, 16
        %v776 = vpop.permute.xlu0 %775
        %777 = vrot.lane.b32.xlu0 %v334, 16
        %v778 = vpop.permute.xlu0 %777
        %779 = vrot.lane.b32.xlu0 %v337, 16
        %v780 = vpop.permute.xlu0 %779
        %781 = vrot.lane.b32.xlu0 %v339, 16
        %v782 = vpop.permute.xlu0 %781
        %783 = vrot.lane.b32.xlu0 %v342, 16
        %v784 = vpop.permute.xlu0 %783
        %785 = vrot.lane.b32.xlu0 %v344, 16
        %v786 = vpop.permute.xlu0 %785
        %787 = vrot.lane.b32.xlu0 %v347, 16
        %v788 = vpop.permute.xlu0 %787
        %789 = vrot.lane.b32.xlu0 %v349, 16
        %v790 = vpop.permute.xlu0 %789
        %791 = vrot.lane.b32.xlu0 %v352, 16
        %v792 = vpop.permute.xlu0 %791
        %793 = vrot.lane.b32.xlu0 %v354, 16
        %v794 = vpop.permute.xlu0 %793
        %795 = vrot.lane.b32.xlu0 %v357, 16
        %v796 = vpop.permute.xlu0 %795
        %797 = vrot.lane.b32.xlu0 %v359, 16
        %v798 = vpop.permute.xlu0 %797
        %799 = vrot.lane.b32.xlu0 %v362, 16
        %v800 = vpop.permute.xlu0 %799
        %801 = vrot.lane.b32.xlu0 %v364, 16
        %v802 = vpop.permute.xlu0 %801
        %803 = vrot.lane.b32.xlu0 %v367, 16
        %v804 = vpop.permute.xlu0 %803
        %805 = vrot.lane.b32.xlu0 %v369, 16
        %v806 = vpop.permute.xlu0 %805
        %807 = vrot.lane.b32.xlu0 %v744, 16
        %v808 = vpop.permute.xlu0 %807
        %809 = vrot.lane.b32.xlu0 %v746, 16
        %v810 = vpop.permute.xlu0 %809
        %v843 = vrot.slane %v235, 2
        %v844 = vrot.slane %v236, 2
        %v845 = vsel %vm466, %v843, %v844
        %v846 = vrot.slane %v237, 2
        %v847 = vsel %vm466, %v844, %v846
        %848 = vrot.lane.b32.xlu0 %v474, 20
        %v849 = vpop.permute.xlu0 %848
        %850 = vrot.lane.b32.xlu0 %v476, 20
        %v851 = vpop.permute.xlu0 %850
        %852 = vrot.lane.b32.xlu0 %v479, 20
        %v853 = vpop.permute.xlu0 %852
        %854 = vrot.lane.b32.xlu0 %v481, 20
        %v855 = vpop.permute.xlu0 %854
        %856 = vrot.lane.b32.xlu0 %v484, 20
        %v857 = vpop.permute.xlu0 %856
        %858 = vrot.lane.b32.xlu0 %v486, 20
        %v859 = vpop.permute.xlu0 %858
        %860 = vrot.lane.b32.xlu0 %v489, 20
        %v861 = vpop.permute.xlu0 %860
        %862 = vrot.lane.b32.xlu0 %v491, 20
        %v863 = vpop.permute.xlu0 %862
        %864 = vrot.lane.b32.xlu0 %v494, 20
        %v865 = vpop.permute.xlu0 %864
        %866 = vrot.lane.b32.xlu0 %v496, 20
        %v867 = vpop.permute.xlu0 %866
        %868 = vrot.lane.b32.xlu0 %v499, 20
        %v869 = vpop.permute.xlu0 %868
        %870 = vrot.lane.b32.xlu0 %v501, 20
        %v871 = vpop.permute.xlu0 %870
        %872 = vrot.lane.b32.xlu0 %v504, 20
        %v873 = vpop.permute.xlu0 %872
        %874 = vrot.lane.b32.xlu0 %v506, 20
        %v875 = vpop.permute.xlu0 %874
        %876 = vrot.lane.b32.xlu0 %v509, 20
        %v877 = vpop.permute.xlu0 %876
        %878 = vrot.lane.b32.xlu0 %v511, 20
        %v879 = vpop.permute.xlu0 %878
        %880 = vrot.lane.b32.xlu0 %v514, 20
        %v881 = vpop.permute.xlu0 %880
        %882 = vrot.lane.b32.xlu0 %v516, 20
        %v883 = vpop.permute.xlu0 %882
        %884 = vrot.lane.b32.xlu0 %v519, 20
        %v885 = vpop.permute.xlu0 %884
        %886 = vrot.lane.b32.xlu0 %v521, 20
        %v887 = vpop.permute.xlu0 %886
        %888 = vrot.lane.b32.xlu0 %v524, 20
        %v889 = vpop.permute.xlu0 %888
        %890 = vrot.lane.b32.xlu0 %v526, 20
        %v891 = vpop.permute.xlu0 %890
        %892 = vrot.lane.b32.xlu0 %v529, 20
        %v893 = vpop.permute.xlu0 %892
        %894 = vrot.lane.b32.xlu0 %v531, 20
        %v895 = vpop.permute.xlu0 %894
        %896 = vrot.lane.b32.xlu0 %v534, 20
        %v897 = vpop.permute.xlu0 %896
        %898 = vrot.lane.b32.xlu0 %v536, 20
        %v899 = vpop.permute.xlu0 %898
        %900 = vrot.lane.b32.xlu0 %v539, 20
        %v901 = vpop.permute.xlu0 %900
        %902 = vrot.lane.b32.xlu0 %v541, 20
        %v903 = vpop.permute.xlu0 %902
        %904 = vrot.lane.b32.xlu0 %v544, 20
        %v905 = vpop.permute.xlu0 %904
        %906 = vrot.lane.b32.xlu0 %v546, 20
        %v907 = vpop.permute.xlu0 %906
        %908 = vrot.lane.b32.xlu0 %v845, 20
        %v909 = vpop.permute.xlu0 %908
        %910 = vrot.lane.b32.xlu0 %v847, 20
        %v911 = vpop.permute.xlu0 %910
        %946 = vrot.lane.b32.xlu0 %v193, 24
        %v947 = vpop.permute.xlu0 %946
        %948 = vrot.lane.b32.xlu0 %v194, 24
        %v949 = vpop.permute.xlu0 %948
        %950 = vrot.lane.b32.xlu0 %v196, 24
        %v951 = vpop.permute.xlu0 %950
        %952 = vrot.lane.b32.xlu0 %v197, 24
        %v953 = vpop.permute.xlu0 %952
        %954 = vrot.lane.b32.xlu0 %v199, 24
        %v955 = vpop.permute.xlu0 %954
        %956 = vrot.lane.b32.xlu0 %v200, 24
        %v957 = vpop.permute.xlu0 %956
        %958 = vrot.lane.b32.xlu0 %v202, 24
        %v959 = vpop.permute.xlu0 %958
        %960 = vrot.lane.b32.xlu0 %v203, 24
        %v961 = vpop.permute.xlu0 %960
        %962 = vrot.lane.b32.xlu0 %v205, 24
        %v963 = vpop.permute.xlu0 %962
        %964 = vrot.lane.b32.xlu0 %v206, 24
        %v965 = vpop.permute.xlu0 %964
        %966 = vrot.lane.b32.xlu0 %v208, 24
        %v967 = vpop.permute.xlu0 %966
        %968 = vrot.lane.b32.xlu0 %v209, 24
        %v969 = vpop.permute.xlu0 %968
        %970 = vrot.lane.b32.xlu0 %v211, 24
        %v971 = vpop.permute.xlu0 %970
        %972 = vrot.lane.b32.xlu0 %v212, 24
        %v973 = vpop.permute.xlu0 %972
        %974 = vrot.lane.b32.xlu0 %v214, 24
        %v975 = vpop.permute.xlu0 %974
        %976 = vrot.lane.b32.xlu0 %v215, 24
        %v977 = vpop.permute.xlu0 %976
        %978 = vrot.lane.b32.xlu0 %v217, 24
        %v979 = vpop.permute.xlu0 %978
        %980 = vrot.lane.b32.xlu0 %v218, 24
        %v981 = vpop.permute.xlu0 %980
        %982 = vrot.lane.b32.xlu0 %v220, 24
        %v983 = vpop.permute.xlu0 %982
        %984 = vrot.lane.b32.xlu0 %v221, 24
        %v985 = vpop.permute.xlu0 %984
        %986 = vrot.lane.b32.xlu0 %v223, 24
        %v987 = vpop.permute.xlu0 %986
        %988 = vrot.lane.b32.xlu0 %v224, 24
        %v989 = vpop.permute.xlu0 %988
        %990 = vrot.lane.b32.xlu0 %v226, 24
        %v991 = vpop.permute.xlu0 %990
        %992 = vrot.lane.b32.xlu0 %v227, 24
        %v993 = vpop.permute.xlu0 %992
        %994 = vrot.lane.b32.xlu0 %v229, 24
        %v995 = vpop.permute.xlu0 %994
        %996 = vrot.lane.b32.xlu0 %v230, 24
        %v997 = vpop.permute.xlu0 %996
        %998 = vrot.lane.b32.xlu0 %v232, 24
        %v999 = vpop.permute.xlu0 %998
        %1000 = vrot.lane.b32.xlu0 %v233, 24
        %v1001 = vpop.permute.xlu0 %1000
        %1002 = vrot.lane.b32.xlu0 %v235, 24
        %v1003 = vpop.permute.xlu0 %1002
        %1004 = vrot.lane.b32.xlu0 %v236, 24
        %v1005 = vpop.permute.xlu0 %1004
        %1006 = vrot.lane.b32.xlu0 %v238, 24
        %v1007 = vpop.permute.xlu0 %1006
        %1008 = vrot.lane.b32.xlu0 %v239, 24
        %v1009 = vpop.permute.xlu0 %1008
        %v1043 = vrot.slane %v238, 1
        %v1044 = vrot.slane %v239, 1
        %v1045 = vsel %vm289, %v1043, %v1044
        %v1046 = vrot.slane %v240, 1
        %v1047 = vsel %vm289, %v1044, %v1046
        %1048 = vrot.lane.b32.xlu0 %v302, 28
        %v1049 = vpop.permute.xlu0 %1048
        %1050 = vrot.lane.b32.xlu0 %v304, 28
        %v1051 = vpop.permute.xlu0 %1050
        %1052 = vrot.lane.b32.xlu0 %v307, 28
        %v1053 = vpop.permute.xlu0 %1052
        %1054 = vrot.lane.b32.xlu0 %v309, 28
        %v1055 = vpop.permute.xlu0 %1054
        %1056 = vrot.lane.b32.xlu0 %v312, 28
        %v1057 = vpop.permute.xlu0 %1056
        %1058 = vrot.lane.b32.xlu0 %v314, 28
        %v1059 = vpop.permute.xlu0 %1058
        %1060 = vrot.lane.b32.xlu0 %v317, 28
        %v1061 = vpop.permute.xlu0 %1060
        %1062 = vrot.lane.b32.xlu0 %v319, 28
        %v1063 = vpop.permute.xlu0 %1062
        %1064 = vrot.lane.b32.xlu0 %v322, 28
        %v1065 = vpop.permute.xlu0 %1064
        %1066 = vrot.lane.b32.xlu0 %v324, 28
        %v1067 = vpop.permute.xlu0 %1066
        %1068 = vrot.lane.b32.xlu0 %v327, 28
        %v1069 = vpop.permute.xlu0 %1068
        %1070 = vrot.lane.b32.xlu0 %v329, 28
        %v1071 = vpop.permute.xlu0 %1070
        %1072 = vrot.lane.b32.xlu0 %v332, 28
        %v1073 = vpop.permute.xlu0 %1072
        %1074 = vrot.lane.b32.xlu0 %v334, 28
        %v1075 = vpop.permute.xlu0 %1074
        %1076 = vrot.lane.b32.xlu0 %v337, 28
        %v1077 = vpop.permute.xlu0 %1076
        %1078 = vrot.lane.b32.xlu0 %v339, 28
        %v1079 = vpop.permute.xlu0 %1078
        %1080 = vrot.lane.b32.xlu0 %v342, 28
        %v1081 = vpop.permute.xlu0 %1080
        %1082 = vrot.lane.b32.xlu0 %v344, 28
        %v1083 = vpop.permute.xlu0 %1082
        %1084 = vrot.lane.b32.xlu0 %v347, 28
        %v1085 = vpop.permute.xlu0 %1084
        %1086 = vrot.lane.b32.xlu0 %v349, 28
        %v1087 = vpop.permute.xlu0 %1086
        %1088 = vrot.lane.b32.xlu0 %v352, 28
        %v1089 = vpop.permute.xlu0 %1088
        %1090 = vrot.lane.b32.xlu0 %v354, 28
        %v1091 = vpop.permute.xlu0 %1090
        %1092 = vrot.lane.b32.xlu0 %v357, 28
        %v1093 = vpop.permute.xlu0 %1092
        %1094 = vrot.lane.b32.xlu0 %v359, 28
        %v1095 = vpop.permute.xlu0 %1094
        %1096 = vrot.lane.b32.xlu0 %v362, 28
        %v1097 = vpop.permute.xlu0 %1096
        %1098 = vrot.lane.b32.xlu0 %v364, 28
        %v1099 = vpop.permute.xlu0 %1098
        %1100 = vrot.lane.b32.xlu0 %v367, 28
        %v1101 = vpop.permute.xlu0 %1100
        %1102 = vrot.lane.b32.xlu0 %v369, 28
        %v1103 = vpop.permute.xlu0 %1102
        %1104 = vrot.lane.b32.xlu0 %v744, 28
        %v1105 = vpop.permute.xlu0 %1104
        %1106 = vrot.lane.b32.xlu0 %v746, 28
        %v1107 = vpop.permute.xlu0 %1106
        %1108 = vrot.lane.b32.xlu0 %v1045, 28
        %v1109 = vpop.permute.xlu0 %1108
        %1110 = vrot.lane.b32.xlu0 %v1047, 28
        %v1111 = vpop.permute.xlu0 %1110
        %v1144 = vrot.slane %v238, 2
        %v1145 = vrot.slane %v239, 2
        %v1146 = vsel %vm466, %v1144, %v1145
        %v1147 = vrot.slane %v240, 2
        %v1148 = vsel %vm466, %v1145, %v1147
        %1149 = vrot.lane.b32.xlu0 %v479, 32
        %v1150 = vpop.permute.xlu0 %1149
        %1151 = vrot.lane.b32.xlu0 %v481, 32
        %v1152 = vpop.permute.xlu0 %1151
        %1153 = vrot.lane.b32.xlu0 %v484, 32
        %v1154 = vpop.permute.xlu0 %1153
        %1155 = vrot.lane.b32.xlu0 %v486, 32
        %v1156 = vpop.permute.xlu0 %1155
        %1157 = vrot.lane.b32.xlu0 %v489, 32
        %v1158 = vpop.permute.xlu0 %1157
        %1159 = vrot.lane.b32.xlu0 %v491, 32
        %v1160 = vpop.permute.xlu0 %1159
        %1161 = vrot.lane.b32.xlu0 %v494, 32
        %v1162 = vpop.permute.xlu0 %1161
        %1163 = vrot.lane.b32.xlu0 %v496, 32
        %v1164 = vpop.permute.xlu0 %1163
        %1165 = vrot.lane.b32.xlu0 %v499, 32
        %v1166 = vpop.permute.xlu0 %1165
        %1167 = vrot.lane.b32.xlu0 %v501, 32
        %v1168 = vpop.permute.xlu0 %1167
        %1169 = vrot.lane.b32.xlu0 %v504, 32
        %v1170 = vpop.permute.xlu0 %1169
        %1171 = vrot.lane.b32.xlu0 %v506, 32
        %v1172 = vpop.permute.xlu0 %1171
        %1173 = vrot.lane.b32.xlu0 %v509, 32
        %v1174 = vpop.permute.xlu0 %1173
        %1175 = vrot.lane.b32.xlu0 %v511, 32
        %v1176 = vpop.permute.xlu0 %1175
        %1177 = vrot.lane.b32.xlu0 %v514, 32
        %v1178 = vpop.permute.xlu0 %1177
        %1179 = vrot.lane.b32.xlu0 %v516, 32
        %v1180 = vpop.permute.xlu0 %1179
        %1181 = vrot.lane.b32.xlu0 %v519, 32
        %v1182 = vpop.permute.xlu0 %1181
        %1183 = vrot.lane.b32.xlu0 %v521, 32
        %v1184 = vpop.permute.xlu0 %1183
        %1185 = vrot.lane.b32.xlu0 %v524, 32
        %v1186 = vpop.permute.xlu0 %1185
        %1187 = vrot.lane.b32.xlu0 %v526, 32
        %v1188 = vpop.permute.xlu0 %1187
        %1189 = vrot.lane.b32.xlu0 %v529, 32
        %v1190 = vpop.permute.xlu0 %1189
        %1191 = vrot.lane.b32.xlu0 %v531, 32
        %v1192 = vpop.permute.xlu0 %1191
        %1193 = vrot.lane.b32.xlu0 %v534, 32
        %v1194 = vpop.permute.xlu0 %1193
        %1195 = vrot.lane.b32.xlu0 %v536, 32
        %v1196 = vpop.permute.xlu0 %1195
        %1197 = vrot.lane.b32.xlu0 %v539, 32
        %v1198 = vpop.permute.xlu0 %1197
        %1199 = vrot.lane.b32.xlu0 %v541, 32
        %v1200 = vpop.permute.xlu0 %1199
        %1201 = vrot.lane.b32.xlu0 %v544, 32
        %v1202 = vpop.permute.xlu0 %1201
        %1203 = vrot.lane.b32.xlu0 %v546, 32
        %v1204 = vpop.permute.xlu0 %1203
        %1205 = vrot.lane.b32.xlu0 %v845, 32
        %v1206 = vpop.permute.xlu0 %1205
        %1207 = vrot.lane.b32.xlu0 %v847, 32
        %v1208 = vpop.permute.xlu0 %1207
        %1209 = vrot.lane.b32.xlu0 %v1146, 32
        %v1210 = vpop.permute.xlu0 %1209
        %1211 = vrot.lane.b32.xlu0 %v1148, 32
        %v1212 = vpop.permute.xlu0 %1211
        %vm1245 = vcmask 31744
        %v1246 = vsel %vm1245, %v187, %v371
        %v1247 = vsel %vm1245, %v188, %v373
        %v1248 = vsel %vm1245, %v190, %v375
        %v1249 = vsel %vm1245, %v191, %v377
        %v1250 = vsel %vm1245, %v193, %v379
        %v1251 = vsel %vm1245, %v194, %v381
        %v1252 = vsel %vm1245, %v196, %v383
        %v1253 = vsel %vm1245, %v197, %v385
        %v1254 = vsel %vm1245, %v199, %v387
        %v1255 = vsel %vm1245, %v200, %v389
        %v1256 = vsel %vm1245, %v202, %v391
        %v1257 = vsel %vm1245, %v203, %v393
        %v1258 = vsel %vm1245, %v205, %v395
        %v1259 = vsel %vm1245, %v206, %v397
        %v1260 = vsel %vm1245, %v208, %v399
        %v1261 = vsel %vm1245, %v209, %v401
        %v1262 = vsel %vm1245, %v211, %v403
        %v1263 = vsel %vm1245, %v212, %v405
        %v1264 = vsel %vm1245, %v214, %v407
        %v1265 = vsel %vm1245, %v215, %v409
        %v1266 = vsel %vm1245, %v217, %v411
        %v1267 = vsel %vm1245, %v218, %v413
        %v1268 = vsel %vm1245, %v220, %v415
        %v1269 = vsel %vm1245, %v221, %v417
        %v1270 = vsel %vm1245, %v223, %v419
        %v1271 = vsel %vm1245, %v224, %v421
        %v1272 = vsel %vm1245, %v226, %v423
        %v1273 = vsel %vm1245, %v227, %v425
        %v1274 = vsel %vm1245, %v229, %v427
        %v1275 = vsel %vm1245, %v230, %v429
        %v1276 = vsel %vm1245, %v232, %v431
        %v1277 = vsel %vm1245, %v233, %v433
        %vm1278 = vcmask 64512
        %v1279 = vsel %vm1278, %v1246, %v548
        %v1280 = vsel %vm1278, %v1247, %v550
        %v1281 = vsel %vm1278, %v1248, %v552
        %v1282 = vsel %vm1278, %v1249, %v554
        %v1283 = vsel %vm1278, %v1250, %v556
        %v1284 = vsel %vm1278, %v1251, %v558
        %v1285 = vsel %vm1278, %v1252, %v560
        %v1286 = vsel %vm1278, %v1253, %v562
        %v1287 = vsel %vm1278, %v1254, %v564
        %v1288 = vsel %vm1278, %v1255, %v566
        %v1289 = vsel %vm1278, %v1256, %v568
        %v1290 = vsel %vm1278, %v1257, %v570
        %v1291 = vsel %vm1278, %v1258, %v572
        %v1292 = vsel %vm1278, %v1259, %v574
        %v1293 = vsel %vm1278, %v1260, %v576
        %v1294 = vsel %vm1278, %v1261, %v578
        %v1295 = vsel %vm1278, %v1262, %v580
        %v1296 = vsel %vm1278, %v1263, %v582
        %v1297 = vsel %vm1278, %v1264, %v584
        %v1298 = vsel %vm1278, %v1265, %v586
        %v1299 = vsel %vm1278, %v1266, %v588
        %v1300 = vsel %vm1278, %v1267, %v590
        %v1301 = vsel %vm1278, %v1268, %v592
        %v1302 = vsel %vm1278, %v1269, %v594
        %v1303 = vsel %vm1278, %v1270, %v596
        %v1304 = vsel %vm1278, %v1271, %v598
        %v1305 = vsel %vm1278, %v1272, %v600
        %v1306 = vsel %vm1278, %v1273, %v602
        %v1307 = vsel %vm1278, %v1274, %v604
        %v1308 = vsel %vm1278, %v1275, %v606
        %v1309 = vsel %vm1278, %v1276, %v608
        %v1310 = vsel %vm1278, %v1277, %v610
        %vm1311 = vcmask 97280
        %v1312 = vsel %vm1311, %v1279, %v646
        %v1313 = vsel %vm1311, %v1280, %v648
        %v1314 = vsel %vm1311, %v1281, %v650
        %v1315 = vsel %vm1311, %v1282, %v652
        %v1316 = vsel %vm1311, %v1283, %v654
        %v1317 = vsel %vm1311, %v1284, %v656
        %v1318 = vsel %vm1311, %v1285, %v658
        %v1319 = vsel %vm1311, %v1286, %v660
        %v1320 = vsel %vm1311, %v1287, %v662
        %v1321 = vsel %vm1311, %v1288, %v664
        %v1322 = vsel %vm1311, %v1289, %v666
        %v1323 = vsel %vm1311, %v1290, %v668
        %v1324 = vsel %vm1311, %v1291, %v670
        %v1325 = vsel %vm1311, %v1292, %v672
        %v1326 = vsel %vm1311, %v1293, %v674
        %v1327 = vsel %vm1311, %v1294, %v676
        %v1328 = vsel %vm1311, %v1295, %v678
        %v1329 = vsel %vm1311, %v1296, %v680
        %v1330 = vsel %vm1311, %v1297, %v682
        %v1331 = vsel %vm1311, %v1298, %v684
        %v1332 = vsel %vm1311, %v1299, %v686
        %v1333 = vsel %vm1311, %v1300, %v688
        %v1334 = vsel %vm1311, %v1301, %v690
        %v1335 = vsel %vm1311, %v1302, %v692
        %v1336 = vsel %vm1311, %v1303, %v694
        %v1337 = vsel %vm1311, %v1304, %v696
        %v1338 = vsel %vm1311, %v1305, %v698
        %v1339 = vsel %vm1311, %v1306, %v700
        %v1340 = vsel %vm1311, %v1307, %v702
        %v1341 = vsel %vm1311, %v1308, %v704
        %v1342 = vsel %vm1311, %v1309, %v706
        %v1343 = vsel %vm1311, %v1310, %v708
        %vm1344 = vcmask 130048
        %v1345 = vsel %vm1344, %v1312, %v748
        %v1346 = vsel %vm1344, %v1313, %v750
        %v1347 = vsel %vm1344, %v1314, %v752
        %v1348 = vsel %vm1344, %v1315, %v754
        %v1349 = vsel %vm1344, %v1316, %v756
        %v1350 = vsel %vm1344, %v1317, %v758
        %v1351 = vsel %vm1344, %v1318, %v760
        %v1352 = vsel %vm1344, %v1319, %v762
        %v1353 = vsel %vm1344, %v1320, %v764
        %v1354 = vsel %vm1344, %v1321, %v766
        %v1355 = vsel %vm1344, %v1322, %v768
        %v1356 = vsel %vm1344, %v1323, %v770
        %v1357 = vsel %vm1344, %v1324, %v772
        %v1358 = vsel %vm1344, %v1325, %v774
        %v1359 = vsel %vm1344, %v1326, %v776
        %v1360 = vsel %vm1344, %v1327, %v778
        %v1361 = vsel %vm1344, %v1328, %v780
        %v1362 = vsel %vm1344, %v1329, %v782
        %v1363 = vsel %vm1344, %v1330, %v784
        %v1364 = vsel %vm1344, %v1331, %v786
        %v1365 = vsel %vm1344, %v1332, %v788
        %v1366 = vsel %vm1344, %v1333, %v790
        %v1367 = vsel %vm1344, %v1334, %v792
        %v1368 = vsel %vm1344, %v1335, %v794
        %v1369 = vsel %vm1344, %v1336, %v796
        %v1370 = vsel %vm1344, %v1337, %v798
        %v1371 = vsel %vm1344, %v1338, %v800
        %v1372 = vsel %vm1344, %v1339, %v802
        %v1373 = vsel %vm1344, %v1340, %v804
        %v1374 = vsel %vm1344, %v1341, %v806
        %v1375 = vsel %vm1344, %v1342, %v808
        %v1376 = vsel %vm1344, %v1343, %v810
        %vm1377 = vcmask 162816
        %v1378 = vsel %vm1377, %v1345, %v849
        %v1379 = vsel %vm1377, %v1346, %v851
        %v1380 = vsel %vm1377, %v1347, %v853
        %v1381 = vsel %vm1377, %v1348, %v855
        %v1382 = vsel %vm1377, %v1349, %v857
        %v1383 = vsel %vm1377, %v1350, %v859
        %v1384 = vsel %vm1377, %v1351, %v861
        %v1385 = vsel %vm1377, %v1352, %v863
        %v1386 = vsel %vm1377, %v1353, %v865
        %v1387 = vsel %vm1377, %v1354, %v867
        %v1388 = vsel %vm1377, %v1355, %v869
        %v1389 = vsel %vm1377, %v1356, %v871
        %v1390 = vsel %vm1377, %v1357, %v873
        %v1391 = vsel %vm1377, %v1358, %v875
        %v1392 = vsel %vm1377, %v1359, %v877
        %v1393 = vsel %vm1377, %v1360, %v879
        %v1394 = vsel %vm1377, %v1361, %v881
        %v1395 = vsel %vm1377, %v1362, %v883
        %v1396 = vsel %vm1377, %v1363, %v885
        %v1397 = vsel %vm1377, %v1364, %v887
        %v1398 = vsel %vm1377, %v1365, %v889
        %v1399 = vsel %vm1377, %v1366, %v891
        %v1400 = vsel %vm1377, %v1367, %v893
        %v1401 = vsel %vm1377, %v1368, %v895
        %v1402 = vsel %vm1377, %v1369, %v897
        %v1403 = vsel %vm1377, %v1370, %v899
        %v1404 = vsel %vm1377, %v1371, %v901
        %v1405 = vsel %vm1377, %v1372, %v903
        %v1406 = vsel %vm1377, %v1373, %v905
        %v1407 = vsel %vm1377, %v1374, %v907
        %v1408 = vsel %vm1377, %v1375, %v909
        %v1409 = vsel %vm1377, %v1376, %v911
        %vm1410 = vcmask 195584
        %v1411 = vsel %vm1410, %v1378, %v947
        %v1412 = vsel %vm1410, %v1379, %v949
        %v1413 = vsel %vm1410, %v1380, %v951
        %v1414 = vsel %vm1410, %v1381, %v953
        %v1415 = vsel %vm1410, %v1382, %v955
        %v1416 = vsel %vm1410, %v1383, %v957
        %v1417 = vsel %vm1410, %v1384, %v959
        %v1418 = vsel %vm1410, %v1385, %v961
        %v1419 = vsel %vm1410, %v1386, %v963
        %v1420 = vsel %vm1410, %v1387, %v965
        %v1421 = vsel %vm1410, %v1388, %v967
        %v1422 = vsel %vm1410, %v1389, %v969
        %v1423 = vsel %vm1410, %v1390, %v971
        %v1424 = vsel %vm1410, %v1391, %v973
        %v1425 = vsel %vm1410, %v1392, %v975
        %v1426 = vsel %vm1410, %v1393, %v977
        %v1427 = vsel %vm1410, %v1394, %v979
        %v1428 = vsel %vm1410, %v1395, %v981
        %v1429 = vsel %vm1410, %v1396, %v983
        %v1430 = vsel %vm1410, %v1397, %v985
        %v1431 = vsel %vm1410, %v1398, %v987
        %v1432 = vsel %vm1410, %v1399, %v989
        %v1433 = vsel %vm1410, %v1400, %v991
        %v1434 = vsel %vm1410, %v1401, %v993
        %v1435 = vsel %vm1410, %v1402, %v995
        %v1436 = vsel %vm1410, %v1403, %v997
        %v1437 = vsel %vm1410, %v1404, %v999
        %v1438 = vsel %vm1410, %v1405, %v1001
        %v1439 = vsel %vm1410, %v1406, %v1003
        %v1440 = vsel %vm1410, %v1407, %v1005
        %v1441 = vsel %vm1410, %v1408, %v1007
        %v1442 = vsel %vm1410, %v1409, %v1009
        %vm1443 = vcmask 228352
        %v1444 = vsel %vm1443, %v1411, %v1049
        %v1445 = vsel %vm1443, %v1412, %v1051
        %v1446 = vsel %vm1443, %v1413, %v1053
        %v1447 = vsel %vm1443, %v1414, %v1055
        %v1448 = vsel %vm1443, %v1415, %v1057
        %v1449 = vsel %vm1443, %v1416, %v1059
        %v1450 = vsel %vm1443, %v1417, %v1061
        %v1451 = vsel %vm1443, %v1418, %v1063
        %v1452 = vsel %vm1443, %v1419, %v1065
        %v1453 = vsel %vm1443, %v1420, %v1067
        %v1454 = vsel %vm1443, %v1421, %v1069
        %v1455 = vsel %vm1443, %v1422, %v1071
        %v1456 = vsel %vm1443, %v1423, %v1073
        %v1457 = vsel %vm1443, %v1424, %v1075
        %v1458 = vsel %vm1443, %v1425, %v1077
        %v1459 = vsel %vm1443, %v1426, %v1079
        %v1460 = vsel %vm1443, %v1427, %v1081
        %v1461 = vsel %vm1443, %v1428, %v1083
        %v1462 = vsel %vm1443, %v1429, %v1085
        %v1463 = vsel %vm1443, %v1430, %v1087
        %v1464 = vsel %vm1443, %v1431, %v1089
        %v1465 = vsel %vm1443, %v1432, %v1091
        %v1466 = vsel %vm1443, %v1433, %v1093
        %v1467 = vsel %vm1443, %v1434, %v1095
        %v1468 = vsel %vm1443, %v1435, %v1097
        %v1469 = vsel %vm1443, %v1436, %v1099
        %v1470 = vsel %vm1443, %v1437, %v1101
        %v1471 = vsel %vm1443, %v1438, %v1103
        %v1472 = vsel %vm1443, %v1439, %v1105
        %v1473 = vsel %vm1443, %v1440, %v1107
        %v1474 = vsel %vm1443, %v1441, %v1109
        %v1475 = vsel %vm1443, %v1442, %v1111
        %vm1476 = vcmask 261120
        %v1477 = vsel %vm1476, %v1444, %v1150
        %v1478 = vsel %vm1476, %v1445, %v1152
        %v1479 = vsel %vm1476, %v1446, %v1154
        %v1480 = vsel %vm1476, %v1447, %v1156
        %v1481 = vsel %vm1476, %v1448, %v1158
        %v1482 = vsel %vm1476, %v1449, %v1160
        %v1483 = vsel %vm1476, %v1450, %v1162
        %v1484 = vsel %vm1476, %v1451, %v1164
        %v1485 = vsel %vm1476, %v1452, %v1166
        %v1486 = vsel %vm1476, %v1453, %v1168
        %v1487 = vsel %vm1476, %v1454, %v1170
        %v1488 = vsel %vm1476, %v1455, %v1172
        %v1489 = vsel %vm1476, %v1456, %v1174
        %v1490 = vsel %vm1476, %v1457, %v1176
        %v1491 = vsel %vm1476, %v1458, %v1178
        %v1492 = vsel %vm1476, %v1459, %v1180
        %v1493 = vsel %vm1476, %v1460, %v1182
        %v1494 = vsel %vm1476, %v1461, %v1184
        %v1495 = vsel %vm1476, %v1462, %v1186
        %v1496 = vsel %vm1476, %v1463, %v1188
        %v1497 = vsel %vm1476, %v1464, %v1190
        %v1498 = vsel %vm1476, %v1465, %v1192
        %v1499 = vsel %vm1476, %v1466, %v1194
        %v1500 = vsel %vm1476, %v1467, %v1196
        %v1501 = vsel %vm1476, %v1468, %v1198
        %v1502 = vsel %vm1476, %v1469, %v1200
        %v1503 = vsel %vm1476, %v1470, %v1202
        %v1504 = vsel %vm1476, %v1471, %v1204
        %v1505 = vsel %vm1476, %v1472, %v1206
        %v1506 = vsel %vm1476, %v1473, %v1208
        %v1507 = vsel %vm1476, %v1474, %v1210
        %v1508 = vsel %vm1476, %v1475, %v1212
        %v1509 = vld [vmem:[%s1] sm:$0xff]
        %v1510 = vld [vmem:[%s1 + $0x8] sm:$0xff]
        %v1511 = vld [vmem:[%s1 + $0x10] sm:$0xff]
        %v1512 = vld [vmem:[%s1 + $0x18] sm:$0xff]
        %v1513 = vld [vmem:[%s1 + $0x20] sm:$0xf]
        %v1514 = vld [vmem:[%s2] sm:$0x1]
        %v1516 = vlaneseq
        %v1517 = vshrl.u32 %v1516, 7
        %v1518 = vsub.s32 0, %v1517
        %v1519 = vrot.slane %v1514, %v1518
        %vm1521 = vcmask 293888
        %v1523 = vsel %vm1521, %v1477, 0
        %v1526 = vsel %vm1521, %v1478, 0
        %v1529 = vsel %vm1521, %v1479, 0
        %v1532 = vsel %vm1521, %v1480, 0
        %v1535 = vsel %vm1521, %v1481, 0
        %v1538 = vsel %vm1521, %v1482, 0
        %v1541 = vsel %vm1521, %v1483, 0
        %v1544 = vsel %vm1521, %v1484, 0
        %v1547 = vsel %vm1521, %v1485, 0
        %v1550 = vsel %vm1521, %v1486, 0
        %v1553 = vsel %vm1521, %v1487, 0
        %v1556 = vsel %vm1521, %v1488, 0
        %v1559 = vsel %vm1521, %v1489, 0
        %v1562 = vsel %vm1521, %v1490, 0
        %v1565 = vsel %vm1521, %v1491, 0
        %v1568 = vsel %vm1521, %v1492, 0
        %v1571 = vsel %vm1521, %v1493, 0
        %v1574 = vsel %vm1521, %v1494, 0
        %v1577 = vsel %vm1521, %v1495, 0
        %v1580 = vsel %vm1521, %v1496, 0
        %v1583 = vsel %vm1521, %v1497, 0
        %v1586 = vsel %vm1521, %v1498, 0
        %v1589 = vsel %vm1521, %v1499, 0
        %v1592 = vsel %vm1521, %v1500, 0
        %v1595 = vsel %vm1521, %v1501, 0
        %v1598 = vsel %vm1521, %v1502, 0
        %v1601 = vsel %vm1521, %v1503, 0
        %v1604 = vsel %vm1521, %v1504, 0
        %v1607 = vsel %vm1521, %v1505, 0
        %v1610 = vsel %vm1521, %v1506, 0
        %v1613 = vsel %vm1521, %v1507, 0
        %v1616 = vsel %vm1521, %v1508, 0
        %vm1618 = vcmask 1043456
        %v1620 = vsel %vm1618, %v1513, 0
        %1622 = vmatprep.subr.mxu0 0.0
        %1623 = vmatpush1.msra.mxu0 %v1509
        %1624 = vmatprep.subr.mxu0 0.0
        %1625 = vmatpush1.msra.mxu0 %v1510
        %1626 = vmatprep.subr.mxu0 0.0
        %1627 = vmatpush1.msra.mxu0 %v1511
        %1628 = vmatprep.subr.mxu0 0.0
        %1629 = vmatpush1.msra.mxu0 %v1512
        %1630 = vmatprep.subr.mxu0 0.0
        %1631 = vmatpush1.msra.mxu0 %v1620
        %1632 = vmatprep.subr.mxu0 0.0
        %1633 = vmatpush1.msra.mxu0 0.0
        %1634 = vmatprep.subr.mxu0 0.0
        %1635 = vmatpush1.msra.mxu0 0.0
        %1636 = vmatprep.subr.mxu0 0.0
        %1637 = vmatpush1.msra.mxu0 0.0
        %1638 = vmatprep.subr.mxu0 0.0
        %1639 = vmatpush1.msra.mxu0 0.0
        %1640 = vmatprep.subr.mxu0 0.0
        %1641 = vmatpush1.msra.mxu0 0.0
        %1642 = vmatprep.subr.mxu0 0.0
        %1643 = vmatpush1.msra.mxu0 0.0
        %1644 = vmatprep.subr.mxu0 0.0
        %1645 = vmatpush1.msra.mxu0 0.0
        %1646 = vmatprep.subr.mxu0 0.0
        %1647 = vmatpush1.msra.mxu0 0.0
        %1648 = vmatprep.subr.mxu0 0.0
        %1649 = vmatpush1.msra.mxu0 0.0
        %1650 = vmatprep.subr.mxu0 0.0
        %1651 = vmatpush1.msra.mxu0 0.0
        %1652 = vmatprep.subr.mxu0 0.0
        %1653 = vmatpush1.msra.mxu0 0.0
        %1654 = vmatprep.subr.mxu0 0.0
        %1655 = vmatpush1.msra.mxu0 0.0
        %1656 = vmatprep.subr.mxu0 0.0
        %1657 = vmatpush1.msra.mxu0 0.0
        %1658 = vmatprep.subr.mxu0 0.0
        %1659 = vmatpush1.msra.mxu0 0.0
        %1660 = vmatprep.subr.mxu0 0.0
        %1661 = vmatpush1.msra.mxu0 0.0
        %1662 = vmatprep.subr.mxu0 0.0
        %1663 = vmatpush1.msra.mxu0 0.0
        %1664 = vmatprep.subr.mxu0 0.0
        %1665 = vmatpush1.msra.mxu0 0.0
        %1666 = vmatprep.subr.mxu0 0.0
        %1667 = vmatpush1.msra.mxu0 0.0
        %1668 = vmatprep.subr.mxu0 0.0
        %1669 = vmatpush1.msra.mxu0 0.0
        %1670 = vmatprep.subr.mxu0 0.0
        %1671 = vmatpush1.msra.mxu0 0.0
        %1672 = vmatprep.subr.mxu0 0.0
        %1673 = vmatpush1.msra.mxu0 0.0
        %1674 = vmatprep.subr.mxu0 0.0
        %1675 = vmatpush1.msra.mxu0 0.0
        %1676 = vmatprep.subr.mxu0 0.0
        %1677 = vmatpush1.msra.mxu0 0.0
        %1678 = vmatprep.subr.mxu0 0.0
        %1679 = vmatpush1.msra.mxu0 0.0
        %1680 = vmatprep.subr.mxu0 0.0
        %1681 = vmatpush1.msra.mxu0 0.0
        %1682 = vmatprep.subr.mxu0 0.0
        %1683 = vmatpush1.msra.mxu0 0.0
        %1684 = vmatprep.subr.mxu0 0.0
        %1685 = vmatpush1.msra.mxu0 0.0
        %1686 = vmatprep.mubr.f32.mxu0 0.0
        %1687 = vmatmul.mubr.f32.gmra.mrb[0].mxu0 %v1523
        %v1688 = vpop.f32.mrb[0].mxu0
        %v1689 = vadd.f32 %v1519, %v1688
        %v1690 = vpop.f32.mrb[0].mxu0
        %1691 = vmatprep.mubr.f32.mxu0 0.0
        %1692 = vmatmul.mubr.f32.gmra.mrb[0].mxu0 %v1526
        %v1693 = vpop.f32.mrb[0].mxu0
        %v1694 = vadd.f32 %v1519, %v1693
        %v1695 = vpop.f32.mrb[0].mxu0
        %1696 = vmatprep.mubr.f32.mxu0 0.0
        %1697 = vmatmul.mubr.f32.gmra.mrb[0].mxu0 %v1529
        %v1698 = vpop.f32.mrb[0].mxu0
        %v1699 = vadd.f32 %v1519, %v1698
        %v1700 = vpop.f32.mrb[0].mxu0
        %1701 = vmatprep.mubr.f32.mxu0 0.0
        %1702 = vmatmul.mubr.f32.gmra.mrb[0].mxu0 %v1532
        %v1703 = vpop.f32.mrb[0].mxu0
        %v1704 = vadd.f32 %v1519, %v1703
        %v1705 = vpop.f32.mrb[0].mxu0
        %1706 = vmatprep.mubr.f32.mxu0 0.0
        %1707 = vmatmul.mubr.f32.gmra.mrb[0].mxu0 %v1535
        %v1708 = vpop.f32.mrb[0].mxu0
        %v1709 = vadd.f32 %v1519, %v1708
        %v1710 = vpop.f32.mrb[0].mxu0
        %1711 = vmatprep.mubr.f32.mxu0 0.0
        %1712 = vmatmul.mubr.f32.gmra.mrb[0].mxu0 %v1538
        %v1713 = vpop.f32.mrb[0].mxu0
        %v1714 = vadd.f32 %v1519, %v1713
        %v1715 = vpop.f32.mrb[0].mxu0
        %1716 = vmatprep.mubr.f32.mxu0 0.0
        %1717 = vmatmul.mubr.f32.gmra.mrb[0].mxu0 %v1541
        %v1718 = vpop.f32.mrb[0].mxu0
        %v1719 = vadd.f32 %v1519, %v1718
        %v1720 = vpop.f32.mrb[0].mxu0
        %1721 = vmatprep.mubr.f32.mxu0 0.0
        %1722 = vmatmul.mubr.f32.gmra.mrb[0].mxu0 %v1544
        %v1723 = vpop.f32.mrb[0].mxu0
        %v1724 = vadd.f32 %v1519, %v1723
        %v1725 = vpop.f32.mrb[0].mxu0
        %1726 = vmatprep.mubr.f32.mxu0 0.0
        %1727 = vmatmul.mubr.f32.gmra.mrb[0].mxu0 %v1547
        %v1728 = vpop.f32.mrb[0].mxu0
        %v1729 = vadd.f32 %v1519, %v1728
        %v1730 = vpop.f32.mrb[0].mxu0
        %1731 = vmatprep.mubr.f32.mxu0 0.0
        %1732 = vmatmul.mubr.f32.gmra.mrb[0].mxu0 %v1550
        %v1733 = vpop.f32.mrb[0].mxu0
        %v1734 = vadd.f32 %v1519, %v1733
        %v1735 = vpop.f32.mrb[0].mxu0
        %1736 = vmatprep.mubr.f32.mxu0 0.0
        %1737 = vmatmul.mubr.f32.gmra.mrb[0].mxu0 %v1553
        %v1738 = vpop.f32.mrb[0].mxu0
        %v1739 = vadd.f32 %v1519, %v1738
        %v1740 = vpop.f32.mrb[0].mxu0
        %1741 = vmatprep.mubr.f32.mxu0 0.0
        %1742 = vmatmul.mubr.f32.gmra.mrb[0].mxu0 %v1556
        %v1743 = vpop.f32.mrb[0].mxu0
        %v1744 = vadd.f32 %v1519, %v1743
        %v1745 = vpop.f32.mrb[0].mxu0
        %1746 = vmatprep.mubr.f32.mxu0 0.0
        %1747 = vmatmul.mubr.f32.gmra.mrb[0].mxu0 %v1559
        %v1748 = vpop.f32.mrb[0].mxu0
        %v1749 = vadd.f32 %v1519, %v1748
        %v1750 = vpop.f32.mrb[0].mxu0
        %1751 = vmatprep.mubr.f32.mxu0 0.0
        %1752 = vmatmul.mubr.f32.gmra.mrb[0].mxu0 %v1562
        %v1753 = vpop.f32.mrb[0].mxu0
        %v1754 = vadd.f32 %v1519, %v1753
        %v1755 = vpop.f32.mrb[0].mxu0
        %1756 = vmatprep.mubr.f32.mxu0 0.0
        %1757 = vmatmul.mubr.f32.gmra.mrb[0].mxu0 %v1565
        %v1758 = vpop.f32.mrb[0].mxu0
        %v1759 = vadd.f32 %v1519, %v1758
        %v1760 = vpop.f32.mrb[0].mxu0
        %1761 = vmatprep.mubr.f32.mxu0 0.0
        %1762 = vmatmul.mubr.f32.gmra.mrb[0].mxu0 %v1568
        %v1763 = vpop.f32.mrb[0].mxu0
        %v1764 = vadd.f32 %v1519, %v1763
        %v1765 = vpop.f32.mrb[0].mxu0
        %1766 = vmatprep.mubr.f32.mxu0 0.0
        %1767 = vmatmul.mubr.f32.gmra.mrb[0].mxu0 %v1571
        %v1768 = vpop.f32.mrb[0].mxu0
        %v1769 = vadd.f32 %v1519, %v1768
        %v1770 = vpop.f32.mrb[0].mxu0
        %1771 = vmatprep.mubr.f32.mxu0 0.0
        %1772 = vmatmul.mubr.f32.gmra.mrb[0].mxu0 %v1574
        %v1773 = vpop.f32.mrb[0].mxu0
        %v1774 = vadd.f32 %v1519, %v1773
        %v1775 = vpop.f32.mrb[0].mxu0
        %1776 = vmatprep.mubr.f32.mxu0 0.0
        %1777 = vmatmul.mubr.f32.gmra.mrb[0].mxu0 %v1577
        %v1778 = vpop.f32.mrb[0].mxu0
        %v1779 = vadd.f32 %v1519, %v1778
        %v1780 = vpop.f32.mrb[0].mxu0
        %1781 = vmatprep.mubr.f32.mxu0 0.0
        %1782 = vmatmul.mubr.f32.gmra.mrb[0].mxu0 %v1580
        %v1783 = vpop.f32.mrb[0].mxu0
        %v1784 = vadd.f32 %v1519, %v1783
        %v1785 = vpop.f32.mrb[0].mxu0
        %1786 = vmatprep.mubr.f32.mxu0 0.0
        %1787 = vmatmul.mubr.f32.gmra.mrb[0].mxu0 %v1583
        %v1788 = vpop.f32.mrb[0].mxu0
        %v1789 = vadd.f32 %v1519, %v1788
        %v1790 = vpop.f32.mrb[0].mxu0
        %1791 = vmatprep.mubr.f32.mxu0 0.0
        %1792 = vmatmul.mubr.f32.gmra.mrb[0].mxu0 %v1586
        %v1793 = vpop.f32.mrb[0].mxu0
        %v1794 = vadd.f32 %v1519, %v1793
        %v1795 = vpop.f32.mrb[0].mxu0
        %1796 = vmatprep.mubr.f32.mxu0 0.0
        %1797 = vmatmul.mubr.f32.gmra.mrb[0].mxu0 %v1589
        %v1798 = vpop.f32.mrb[0].mxu0
        %v1799 = vadd.f32 %v1519, %v1798
        %v1800 = vpop.f32.mrb[0].mxu0
        %1801 = vmatprep.mubr.f32.mxu0 0.0
        %1802 = vmatmul.mubr.f32.gmra.mrb[0].mxu0 %v1592
        %v1803 = vpop.f32.mrb[0].mxu0
        %v1804 = vadd.f32 %v1519, %v1803
        %v1805 = vpop.f32.mrb[0].mxu0
        %1806 = vmatprep.mubr.f32.mxu0 0.0
        %1807 = vmatmul.mubr.f32.gmra.mrb[0].mxu0 %v1595
        %v1808 = vpop.f32.mrb[0].mxu0
        %v1809 = vadd.f32 %v1519, %v1808
        %v1810 = vpop.f32.mrb[0].mxu0
        %1811 = vmatprep.mubr.f32.mxu0 0.0
        %1812 = vmatmul.mubr.f32.gmra.mrb[0].mxu0 %v1598
        %v1813 = vpop.f32.mrb[0].mxu0
        %v1814 = vadd.f32 %v1519, %v1813
        %v1815 = vpop.f32.mrb[0].mxu0
        %1816 = vmatprep.mubr.f32.mxu0 0.0
        %1817 = vmatmul.mubr.f32.gmra.mrb[0].mxu0 %v1601
        %v1818 = vpop.f32.mrb[0].mxu0
        %v1819 = vadd.f32 %v1519, %v1818
        %v1820 = vpop.f32.mrb[0].mxu0
        %1821 = vmatprep.mubr.f32.mxu0 0.0
        %1822 = vmatmul.mubr.f32.gmra.mrb[0].mxu0 %v1604
        %v1823 = vpop.f32.mrb[0].mxu0
        %v1824 = vadd.f32 %v1519, %v1823
        %v1825 = vpop.f32.mrb[0].mxu0
        %1826 = vmatprep.mubr.f32.mxu0 0.0
        %1827 = vmatmul.mubr.f32.gmra.mrb[0].mxu0 %v1607
        %v1828 = vpop.f32.mrb[0].mxu0
        %v1829 = vadd.f32 %v1519, %v1828
        %v1830 = vpop.f32.mrb[0].mxu0
        %1831 = vmatprep.mubr.f32.mxu0 0.0
        %1832 = vmatmul.mubr.f32.gmra.mrb[0].mxu0 %v1610
        %v1833 = vpop.f32.mrb[0].mxu0
        %v1834 = vadd.f32 %v1519, %v1833
        %v1835 = vpop.f32.mrb[0].mxu0
        %1836 = vmatprep.mubr.f32.mxu0 0.0
        %1837 = vmatmul.mubr.f32.gmra.mrb[0].mxu0 %v1613
        %v1838 = vpop.f32.mrb[0].mxu0
        %v1839 = vadd.f32 %v1519, %v1838
        %v1840 = vpop.f32.mrb[0].mxu0
        %1841 = vmatprep.mubr.f32.mxu0 0.0
        %1842 = vmatmul.mubr.f32.gmra.mrb[0].mxu0 %v1616
        %v1843 = vpop.f32.mrb[0].mxu0
        %v1844 = vadd.f32 %v1519, %v1843
        %v1845 = vpop.f32.mrb[0].mxu0
        %1846 = vdwg.mxu0
        %v1847 = vmax.f32 %v1689, 0.0
        %v1848 = vmax.f32 %v1694, 0.0
        %v1849 = vmax.f32 %v1699, 0.0
        %v1850 = vmax.f32 %v1704, 0.0
        %v1851 = vmax.f32 %v1709, 0.0
        %v1852 = vmax.f32 %v1714, 0.0
        %v1853 = vmax.f32 %v1719, 0.0
        %v1854 = vmax.f32 %v1724, 0.0
        %v1855 = vmax.f32 %v1729, 0.0
        %v1856 = vmax.f32 %v1734, 0.0
        %v1857 = vmax.f32 %v1739, 0.0
        %v1858 = vmax.f32 %v1744, 0.0
        %v1859 = vmax.f32 %v1749, 0.0
        %v1860 = vmax.f32 %v1754, 0.0
        %v1861 = vmax.f32 %v1759, 0.0
        %v1862 = vmax.f32 %v1764, 0.0
        %v1863 = vmax.f32 %v1769, 0.0
        %v1864 = vmax.f32 %v1774, 0.0
        %v1865 = vmax.f32 %v1779, 0.0
        %v1866 = vmax.f32 %v1784, 0.0
        %v1867 = vmax.f32 %v1789, 0.0
        %v1868 = vmax.f32 %v1794, 0.0
        %v1869 = vmax.f32 %v1799, 0.0
        %v1870 = vmax.f32 %v1804, 0.0
        %v1871 = vmax.f32 %v1809, 0.0
        %v1872 = vmax.f32 %v1814, 0.0
        %v1873 = vmax.f32 %v1819, 0.0
        %v1874 = vmax.f32 %v1824, 0.0
        %v1875 = vmax.f32 %v1829, 0.0
        %v1876 = vmax.f32 %v1834, 0.0
        %v1877 = vmax.f32 %v1839, 0.0
        %v1878 = vmax.f32 %v1844, 0.0
        %1879 = vst [vmem:[%s177] sm:$0xff] %v1847
        %1880 = vst [vmem:[%s177 + $0x8] sm:$0xff] %v1848
        %1881 = vst [vmem:[%s177 + $0x10] sm:$0xff] %v1849
        %1882 = vst [vmem:[%s177 + $0x18] sm:$0xff] %v1850
        %1883 = vst [vmem:[%s177 + $0x20] sm:$0xff] %v1851
        %1884 = vst [vmem:[%s177 + $0x28] sm:$0xff] %v1852
        %1885 = vst [vmem:[%s177 + $0x30] sm:$0xff] %v1853
        %1886 = vst [vmem:[%s177 + $0x38] sm:$0xff] %v1854
        %1887 = vst [vmem:[%s177 + $0x40] sm:$0xff] %v1855
        %1888 = vst [vmem:[%s177 + $0x48] sm:$0xff] %v1856
        %1889 = vst [vmem:[%s177 + $0x50] sm:$0xff] %v1857
        %1890 = vst [vmem:[%s177 + $0x58] sm:$0xff] %v1858
        %1891 = vst [vmem:[%s177 + $0x60] sm:$0xff] %v1859
        %1892 = vst [vmem:[%s177 + $0x68] sm:$0xff] %v1860
        %1893 = vst [vmem:[%s177 + $0x70] sm:$0xff] %v1861
        %1894 = vst [vmem:[%s177 + $0x78] sm:$0xff] %v1862
        %1895 = vst [vmem:[%s177 + $0x80] sm:$0xff] %v1863
        %1896 = vst [vmem:[%s177 + $0x88] sm:$0xff] %v1864
        %1897 = vst [vmem:[%s177 + $0x90] sm:$0xff] %v1865
        %1898 = vst [vmem:[%s177 + $0x98] sm:$0xff] %v1866
        %1899 = vst [vmem:[%s177 + $0xa0] sm:$0xff] %v1867
        %1900 = vst [vmem:[%s177 + $0xa8] sm:$0xff] %v1868
        %1901 = vst [vmem:[%s177 + $0xb0] sm:$0xff] %v1869
        %1902 = vst [vmem:[%s177 + $0xb8] sm:$0xff] %v1870
        %1903 = vst [vmem:[%s177 + $0xc0] sm:$0xff] %v1871
        %1904 = vst [vmem:[%s177 + $0xc8] sm:$0xff] %v1872
        %1905 = vst [vmem:[%s177 + $0xd0] sm:$0xff] %v1873
        %1906 = vst [vmem:[%s177 + $0xd8] sm:$0xff] %v1874
        %1907 = vst [vmem:[%s177 + $0xe0] sm:$0xff] %v1875
        %1908 = vst [vmem:[%s177 + $0xe8] sm:$0xff] %v1876
        %1909 = vst [vmem:[%s177 + $0xf0] sm:$0xff] %v1877
        %1910 = vst [vmem:[%s177 + $0xf8] sm:$0xff] %v1878
        %s1911 = sand.u32 %s107, 1
        %s1912 = scalar_lea.sflag [#allocation3], %s1911
        %s1913 = sand.u32 %s107, 1
        %s1914 = smul.addr %s1913, 256
        %s1915 = scalar_lea.vmem [#allocation2], %s1914
        // Predicated region
        $region33: #{tpu_custom_call.1} parent=31 // pred_check
          %p1916 = pneg %p117
        $region34: #{tpu_custom_call.1} parent=31 // pred_check_branch
          %1918 = sbr.rel (%p1916) target = $region36
        $region35: #{tpu_custom_call.1} parent=31 // pred_region
          %s1919 = smul.u32 16, %s22
          %s1921 = ssub.s32 4096, 4096
          %1922 = vsyncadd %s1912, %s1921
          %s1923 = smul.addr %s1919, 2
          %s1924 = smul.addr %s21, 32
          %s1925 = sadd.s32 %s1923, %s1924
          %s1926 = smul.addr %s1925, 128
          %s1927 = scalar_lea.hbm %s3, %s1926
          %s1928 = sshll.u32 %s1915, 4
          %s1929 = int_to_ptr.vmem [resolvable:$true] %s1928
          %1934 = dma.vmem_to_hbm [thread:$0]  %s1929, 4096, %s1927, %s1912, 128, 128, 8
        $region36: #{tpu_custom_call.1} parent=31 // pred_fallthru
          _
      $region32: #{tpu_custom_call.1} parent=5 // pred_fallthru
        _
      %p1935 = scmp.le.s32.totalorder 2, %s12
      // Predicated region
      $region37: #{tpu_custom_call.1} parent=5 // pred_check
        %p1936 = pneg %p1935
      $region38: #{tpu_custom_call.1} parent=5 // pred_check_branch
        %1938 = sbr.rel (%p1936) target = $region40
      $region39: #{tpu_custom_call.1} parent=5 // pred_region
        %s1939 = ssub.s32 %s12, 2
        // Predicated region
        $region41: #{tpu_custom_call.1} parent=39 // pred_check
          %p1940 = pneg %p123
        $region42: #{tpu_custom_call.1} parent=39 // pred_check_branch
          %1942 = sbr.rel (%p1940) target = $region44
        $region43: #{tpu_custom_call.1} parent=39 // pred_region
          %s1943 = sand.u32 %s108, 1
          %s1944 = scalar_lea.sflag [#allocation3], %s1943
          %s1945 = sand.u32 %s108, 1
          %s1946 = smul.addr %s1945, 256
          %s1947 = scalar_lea.vmem [#allocation2], %s1946
          %1948 = dma.done %s1944, 4096
        $region44: #{tpu_custom_call.1} parent=39 // pred_fallthru
          _
      $region40: #{tpu_custom_call.1} parent=5 // pred_fallthru
        _
    $region6: #{tpu_custom_call.1} parent=1 // loop_footer
      %s16 = sadd.s32 1, %s12
    $region7: #{tpu_custom_call.1} parent=1 // loop_footer_branch
      %11 = sbr.rel target = $region3
    $region8: #{tpu_custom_call.1} parent=1 // loop_exit
      _
    %1949 = vsyncpa [#allocation3], 1
    %s1950 = scalar_lea.sflag [#allocation3], 1
    %1951 = vsyncpa %s1950, 1

</llo_original>
